<compile_context>
chip_gen: v5e
topology: v5e:2x2
jax: 0.10.0
libtpu: 0.0.40
codegen_flags: <defaults>
</compile_context>

<pallas_src>
import math

import jax
import jax.numpy as jnp
import numpy as np
from jax.experimental import pallas as pl
from jax.experimental.pallas import tpu as pltpu

# ---- problem sizes (small, consistent with the module) ----
B = 2          # batch
T = 8          # forecasting_horizon (target / future sequence length)
S = 16         # memory (encoder_output_net) sequence length
D = 32         # d_model
H = 4          # nhead
HD = D // H    # head dim
F = 4 * D      # dim_feedforward
EPS = 1e-5     # LayerNorm eps (PyTorch default)
OUT_W = 128    # lane-dense output width

# ---- packed vector-slab row layout (width 128, f32) ----
_R_PS = 0                 # rows 0..B*T-1 : positional table tiled to (B*T, D)
_R_SA_BQKV = 16           # (1, 3D)  self-attn bq|bk|bv
_R_SA_BO = 17             # (1, D)
_R_CA_BQ = 18             # (1, D)
_R_CA_BKV = 19            # (1, 2D)  cross-attn bk|bv
_R_CA_BO = 20             # (1, D)
_R_B1 = 21                # (1, F)
_R_B2 = 22                # (1, D)
_R_G1, _R_BE1 = 23, 24
_R_G2, _R_BE2 = 25, 26
_R_G3, _R_BE3 = 27, 28
_VEC_ROWS = 32            # 29 rows used, padded to a multiple of 8
_VEC_W = 128

# ---- packed weight-slab column layout (w_in: (D, 768) bf16, 128-aligned segments) ----
_C_SA_QKV = 0      # self-attn Wq|Wk|Wv (3D = 96 cols used)
_C_SA_WO = 128     # self-attn Wo       (D)
_C_CA_WQ = 256     # cross-attn Wq      (D)
_C_CA_WKV = 384    # cross-attn Wk|Wv   (2D)
_C_CA_WO = 512     # cross-attn Wo      (D)
_C_W1 = 640        # W1                 (F = 128)
_W_IN_COLS = 768
# w2 (F, D) bf16 is a separate input.


# ---------------------------------------------------------------------------
# Pallas kernel (single grid step handles all B batch elements)
# ---------------------------------------------------------------------------
def _decoder_kernel(x_ref, mem_ref, w_ref, w2_ref, vec_ref, out_ref):
    f32 = jnp.float32
    bf16 = jnp.bfloat16
    scale = 1.0 / math.sqrt(HD)
    inv_sqrt2 = 1.0 / math.sqrt(2.0)

    def vrow(r, w):
        return vec_ref[r:r + 1, 0:w]                         # (1, w) f32

    def mm(a, w):                                            # bf16 MXU, f32 accumulate
        return jnp.dot(a.astype(bf16), w, preferred_element_type=f32)

    def layer_norm(v, gi, bi):
        mu = jnp.mean(v, axis=-1, keepdims=True)
        var = jnp.mean(jnp.square(v - mu), axis=-1, keepdims=True)
        return (v - mu) * jax.lax.rsqrt(var + EPS) * vrow(gi, D) + vrow(bi, D)

    def gelu_exact(v):                                       # PyTorch F.gelu (erf form)
        return 0.5 * v * (1.0 + jax.lax.erf(v * inv_sqrt2))

    # causal mask, built ONCE (hoisted out of the per-head loop)
    row_i = jax.lax.broadcasted_iota(jnp.int32, (T, T), 0)
    col_i = jax.lax.broadcasted_iota(jnp.int32, (T, T), 1)
    causal_ok = col_i <= row_i

    def attend(qp, kp, vp, wo, bo_row, tk, mask):
        # qp: (B*T, D) f32, kp/vp: (B*tk, D) f32, wo: (D, D) bf16
        outs = []
        for b in range(B):                                   # static, B == 2
            qb = qp[b * T:(b + 1) * T, :].astype(bf16)       # cast once per batch
            kb = kp[b * tk:(b + 1) * tk, :].astype(bf16)
            vb = vp[b * tk:(b + 1) * tk, :].astype(bf16)
            heads = []
            for h in range(H):                               # static per-head loop
                qh = qb[:, h * HD:(h + 1) * HD]
                kh = kb[:, h * HD:(h + 1) * HD]
                s = jax.lax.dot_general(
                    qh, kh, (((1,), (1,)), ((), ())),
                    preferred_element_type=f32) * scale      # (T, tk)
                if mask is not None:
                    s = jnp.where(mask, s, f32(-1e30))
                s = s - jnp.max(s, axis=-1, keepdims=True)
                e = jnp.exp(s)
                prob = e / jnp.sum(e, axis=-1, keepdims=True)   # exact divide
                heads.append(jnp.dot(prob.astype(bf16), vb[:, h * HD:(h + 1) * HD],
                                     preferred_element_type=f32))   # (T, HD)
            # merged output projection: one (T, D) @ (D, D) matmul per batch
            o_cat = jnp.concatenate(heads, axis=-1)          # (T, D)
            outs.append(jnp.dot(o_cat.astype(bf16), wo, preferred_element_type=f32))
        o = jnp.concatenate(outs, axis=0)                    # (B*T, D)
        return o + bo_row

    x = x_ref[...]                    # (B*T, D) f32
    mem = mem_ref[...]                # (B*S, D) f32

    # positional encoding add (is_first_layer=True); table is pre-tiled to (B*T, D),
    # dropout == identity in eval
    x = x + vec_ref[_R_PS:_R_PS + B * T, 0:D]

    # ---- self-attention block (post-norm), fused QKV projection ----
    qkv = mm(x, w_ref[:, _C_SA_QKV:_C_SA_QKV + 3 * D]) + vrow(_R_SA_BQKV, 3 * D)
    sa = attend(qkv[:, 0:D], qkv[:, D:2 * D], qkv[:, 2 * D:3 * D],
                w_ref[:, _C_SA_WO:_C_SA_WO + D], vrow(_R_SA_BO, D), T, causal_ok)
    x = layer_norm(x + sa, _R_G1, _R_BE1)

    # ---- cross-attention block against encoder_output_net (fused K|V) ----
    q = mm(x, w_ref[:, _C_CA_WQ:_C_CA_WQ + D]) + vrow(_R_CA_BQ, D)
    kv = mm(mem, w_ref[:, _C_CA_WKV:_C_CA_WKV + 2 * D]) + vrow(_R_CA_BKV, 2 * D)
    ca = attend(q, kv[:, 0:D], kv[:, D:2 * D],
                w_ref[:, _C_CA_WO:_C_CA_WO + D], vrow(_R_CA_BO, D), S, None)
    x = layer_norm(x + ca, _R_G2, _R_BE2)

    # ---- feed-forward block ----
    hft = gelu_exact(mm(x, w_ref[:, _C_W1:_C_W1 + F]) + vrow(_R_B1, F))
    hft = mm(hft, w2_ref[...]) + vrow(_R_B2, D)
    x = layer_norm(x + hft, _R_G3, _R_BE3)

    # lane-dense (unmasked) store: pad lanes D..127 with zeros, wrapper slices [:, :D]
    out_ref[...] = jnp.concatenate(
        [x, jnp.zeros((B * T, OUT_W - D), f32)], axis=1).astype(out_ref.dtype)


# ---------------------------------------------------------------------------
# Parameter packing: 26 params -> 3 DMA slabs (weights 128-lane aligned)
# ---------------------------------------------------------------------------
def pack_params(p):
    def seg(mats):       # concat (D, k) mats and pad the segment to 128 columns
        m = jnp.concatenate(mats, axis=1)
        return jnp.pad(m, ((0, 0), (0, 128 - m.shape[1])))

    w_in = jnp.concatenate(
        [seg([p["sa_wq"], p["sa_wk"], p["sa_wv"]]),   # cols   0..127
         seg([p["sa_wo"]]),                           # cols 128..255
         seg([p["ca_wq"]]),                           # cols 256..383
         seg([p["ca_wk"], p["ca_wv"]]),               # cols 384..511
         seg([p["ca_wo"]]),                           # cols 512..639
         seg([p["w1"]])],                             # cols 640..767
        axis=1).astype(jnp.bfloat16)                  # (D, 768) bf16 ~ 48 KB
    assert w_in.shape == (D, _W_IN_COLS)
    w2 = p["w2"].astype(jnp.bfloat16)                 # (F, D) = (128, 32)

    def row(v):
        v = jnp.asarray(v, jnp.float32).reshape(1, -1)
        return jnp.pad(v, ((0, 0), (0, _VEC_W - v.shape[1])))

    ps_tiled = jnp.tile(p["ps"].astype(jnp.float32), (B, 1))       # (B*T, D)
    rows = [
        jnp.pad(ps_tiled, ((0, 0), (0, _VEC_W - D))),              # rows 0..15
        row(jnp.concatenate([p["sa_bq"], p["sa_bk"], p["sa_bv"]], axis=1)),
        row(p["sa_bo"]),
        row(p["ca_bq"]),
        row(jnp.concatenate([p["ca_bk"], p["ca_bv"]], axis=1)),
        row(p["ca_bo"]),
        row(p["b1"]),
        row(p["b2"]),
        row(p["g1"]), row(p["be1"]),
        row(p["g2"]), row(p["be2"]),
        row(p["g3"]), row(p["be3"]),
    ]
    vec = jnp.concatenate(rows, axis=0)                            # (29, 128)
    vec = jnp.pad(vec, ((0, _VEC_ROWS - vec.shape[0]), (0, 0)))    # (32, 128)
    return w_in, w2, vec


# ---------------------------------------------------------------------------
# Wrapper: single pallas_call, single grid step (latency-bound problem size)
# ---------------------------------------------------------------------------
def transformer_decoder_module(x_future, encoder_output_layer, encoder_output_net,
                               hx1, hx2, params):
    # encoder_output_layer, hx1, hx2 are unused by the transformer decoder layer.
    del encoder_output_layer, hx1, hx2
    w_in, w2, vec = pack_params(params)

    # flatten (B, T, D) -> (B*T, D): pure layout plumbing in the wrapper
    x2d = x_future.reshape(B * T, D)
    mem2d = encoder_output_net.reshape(B * S, D)

    full = lambda g: (0, 0)
    out2d = pl.pallas_call(
        _decoder_kernel,
        out_shape=jax.ShapeDtypeStruct((B * T, OUT_W), jnp.float32),
        grid=(1,),
        in_specs=[
            pl.BlockSpec((B * T, D), full),      # x_future rows
            pl.BlockSpec((B * S, D), full),      # memory rows
            pl.BlockSpec(w_in.shape, full),      # packed weights (128-aligned segments)
            pl.BlockSpec(w2.shape, full),        # W2
            pl.BlockSpec(vec.shape, full),       # biases / LN params / positional slab
        ],
        out_specs=pl.BlockSpec((B * T, OUT_W), full),
        compiler_params=pltpu.CompilerParams(dimension_semantics=("arbitrary",)),
    )(x2d, mem2d, w_in, w2, vec)
    return out2d[:, 0:D].reshape(B, T, D)


# ---------------------------------------------------------------------------
# Deterministic parameter init (shapes implied by TransformerDecoderLayer(32, nhead=4))
# ---------------------------------------------------------------------------
def init_params(key):
    ks = iter(jax.random.split(key, 64))

    def u(shape, scale):
        return jax.random.uniform(next(ks), shape, jnp.float32, -scale, scale)

    p = {}
    p["ps"] = u((T, D), 0.02)                                   # W_pos ~ U(-0.02, 0.02)
    for pre in ("sa", "ca"):                                    # self / cross attention
        for nm in ("q", "k", "v", "o"):
            p[f"{pre}_w{nm}"] = u((D, D), 1.0 / math.sqrt(D))   # (in, out)
            p[f"{pre}_b{nm}"] = u((1, D), 0.05)
    p["w1"] = u((D, F), 1.0 / math.sqrt(D))
    p["b1"] = u((1, F), 0.05)
    p["w2"] = u((F, D), 1.0 / math.sqrt(F))
    p["b2"] = u((1, D), 0.05)
    for i in (1, 2, 3):                                         # LayerNorm affine params
        p[f"g{i}"] = 1.0 + u((1, D), 0.05)
        p[f"be{i}"] = u((1, D), 0.05)
    return p


# ---------------------------------------------------------------------------
# Pure-JAX reference (mirrors nn.TransformerDecoderLayer, eval mode, f32)
# ---------------------------------------------------------------------------
def ref_forward(x, mem, p):
    def ln(v, i):
        g, b = p[f"g{i}"], p[f"be{i}"]
        mu = v.mean(-1, keepdims=True)
        var = ((v - mu) ** 2).mean(-1, keepdims=True)
        return (v - mu) / jnp.sqrt(var + EPS) * g + b

    def mha(q_in, kv_in, pre, causal):
        wq, bq = p[f"{pre}_wq"], p[f"{pre}_bq"]
        wk, bk = p[f"{pre}_wk"], p[f"{pre}_bk"]
        wv, bv = p[f"{pre}_wv"], p[f"{pre}_bv"]
        wo, bo = p[f"{pre}_wo"], p[f"{pre}_bo"]
        b_, tq, _ = q_in.shape
        tk = kv_in.shape[1]
        q = (q_in @ wq + bq).reshape(b_, tq, H, HD)
        k = (kv_in @ wk + bk).reshape(b_, tk, H, HD)
        v = (kv_in @ wv + bv).reshape(b_, tk, H, HD)
        s = jnp.einsum("bqhd,bkhd->bhqk", q, k) / math.sqrt(HD)
        if causal:
            m = jnp.tril(jnp.ones((tq, tk), bool))
            s = jnp.where(m[None, None], s, -1e30)
        a = jax.nn.softmax(s, axis=-1)
        o = jnp.einsum("bhqk,bkhd->bqhd", a, v).reshape(b_, tq, D)
        return o @ wo + bo

    x = x + p["ps"][None]
    x = ln(x + mha(x, x, "sa", True), 1)
    x = ln(x + mha(x, mem, "ca", False), 2)
    h = jax.nn.gelu(x @ p["w1"] + p["b1"], approximate=False)
    x = ln(x + h @ p["w2"] + p["b2"], 3)
    return x


if __name__ == "__main__":
    key = jax.random.PRNGKey(0)
    kx, kmem, kenc, kh1, kh2, kp = jax.random.split(key, 6)

    x_future = jax.random.normal(kx, (B, T, D), jnp.float32)
    encoder_output_net = jax.random.normal(kmem, (B, S, D), jnp.float32)
    encoder_output_layer = jax.random.normal(kenc, (B, S, D), jnp.float32)  # unused
    hx1 = jax.random.normal(kh1, (B, D), jnp.float32)                       # unused
    hx2 = jax.random.normal(kh2, (B, D), jnp.float32)                       # unused

    params = init_params(kp)

    out = transformer_decoder_module(x_future, encoder_output_layer,
                                     encoder_output_net, hx1, hx2, params)
    out = jax.block_until_ready(out)

    with jax.default_matmul_precision("highest"):
        ref = jax.block_until_ready(ref_forward(x_future, encoder_output_net, params))

    # tolerance covers bf16 MXU inputs (f32 accumulate); softmax divide is now exact
    np.testing.assert_allclose(np.asarray(out), np.asarray(ref), rtol=3e-2, atol=3e-2)
    assert out.shape == (B, T, D)
    print("KERNEL_OK")
</pallas_src>

<mosaic_0001>
module attributes {stable_mosaic.version = 11 : i64} {
  func.func @_decoder_kernel(%arg0: i32, %arg1: memref<16x32xf32, #tpu.memory_space<vmem>>, %arg2: memref<32x32xf32, #tpu.memory_space<vmem>>, %arg3: memref<32x768xbf16, #tpu.memory_space<vmem>>, %arg4: memref<128x32xbf16, #tpu.memory_space<vmem>>, %arg5: memref<32x128xf32, #tpu.memory_space<vmem>>, %arg6: memref<16x128xf32, #tpu.memory_space<vmem>>) attributes {dimension_semantics = [#tpu.dimension_semantics<arbitrary>], iteration_bounds = array<i64: 1>, scalar_prefetch = 0 : i64, scratch_operands = 0 : i64, tpu.core_type = #tpu.core_type<tc>, window_params = [{pipeline_mode = #tpu.pipeline_mode<synchronous>, transform_indices = @transform_0, window_bounds = array<i64: 16, 32>}, {pipeline_mode = #tpu.pipeline_mode<synchronous>, transform_indices = @transform_1, window_bounds = array<i64: 32, 32>}, {pipeline_mode = #tpu.pipeline_mode<synchronous>, transform_indices = @transform_2, window_bounds = array<i64: 32, 768>}, {pipeline_mode = #tpu.pipeline_mode<synchronous>, transform_indices = @transform_3, window_bounds = array<i64: 128, 32>}, {pipeline_mode = #tpu.pipeline_mode<synchronous>, transform_indices = @transform_4, window_bounds = array<i64: 32, 128>}, {pipeline_mode = #tpu.pipeline_mode<synchronous>, transform_indices = @transform_5, window_bounds = array<i64: 16, 128>}]} {
    %0 = tpu.iota {dimensions = array<i32: 0>} : vector<8x8xi32>
    %1 = tpu.iota {dimensions = array<i32: 1>} : vector<8x8xi32>
    %2 = arith.cmpi sle, %1, %0 : vector<8x8xi32>
    %c0 = arith.constant 0 : index
    %c0_0 = arith.constant 0 : index
    %3 = vector.load %arg1[%c0, %c0_0] : memref<16x32xf32, #tpu.memory_space<vmem>>, vector<16x32xf32>
    %c0_1 = arith.constant 0 : index
    %c0_2 = arith.constant 0 : index
    %4 = vector.load %arg2[%c0_1, %c0_2] : memref<32x32xf32, #tpu.memory_space<vmem>>, vector<32x32xf32>
    %c0_3 = arith.constant 0 : index
    %c0_4 = arith.constant 0 : index
    %5 = vector.load %arg5[%c0_3, %c0_4] : memref<32x128xf32, #tpu.memory_space<vmem>>, vector<16x32xf32>
    %6 = arith.addf %3, %5 : vector<16x32xf32>
    %c0_5 = arith.constant 0 : index
    %c0_6 = arith.constant 0 : index
    %7 = vector.load %arg3[%c0_5, %c0_6] : memref<32x768xbf16, #tpu.memory_space<vmem>>, vector<32x96xbf16>
    %8 = arith.truncf %6 : vector<16x32xf32> to vector<16x32xbf16>
    %cst = arith.constant dense<0.000000e+00> : vector<16x96xf32>
    %9 = tpu.matmul %8, %7, %cst {dimension_numbers = #tpu.dot_dimension_numbers<[1], [0], [0], [1], [0, 0, 1, 1], [], []>} : vector<16x32xbf16>, vector<32x96xbf16>, vector<16x96xf32> -> vector<16x96xf32>
    %c16 = arith.constant 16 : index
    %c0_7 = arith.constant 0 : index
    %10 = vector.load %arg5[%c16, %c0_7] : memref<32x128xf32, #tpu.memory_space<vmem>>, vector<1x96xf32>
    %11 = vector.broadcast %10 : vector<1x96xf32> to vector<16x96xf32>
    %12 = arith.addf %9, %11 : vector<16x96xf32>
    %13 = vector.extract_strided_slice %12 {offsets = [0, 0], sizes = [16, 32], strides = [1, 1]} : vector<16x96xf32> to vector<16x32xf32>
    %14 = vector.extract_strided_slice %12 {offsets = [0, 32], sizes = [16, 32], strides = [1, 1]} : vector<16x96xf32> to vector<16x32xf32>
    %15 = vector.extract_strided_slice %12 {offsets = [0, 64], sizes = [16, 32], strides = [1, 1]} : vector<16x96xf32> to vector<16x32xf32>
    %c0_8 = arith.constant 0 : index
    %c128 = arith.constant 128 : index
    %16 = vector.load %arg3[%c0_8, %c128] : memref<32x768xbf16, #tpu.memory_space<vmem>>, vector<32x32xbf16>
    %c17 = arith.constant 17 : index
    %c0_9 = arith.constant 0 : index
    %17 = vector.load %arg5[%c17, %c0_9] : memref<32x128xf32, #tpu.memory_space<vmem>>, vector<1x32xf32>
    %18 = vector.extract_strided_slice %13 {offsets = [0, 0], sizes = [8, 32], strides = [1, 1]} : vector<16x32xf32> to vector<8x32xf32>
    %19 = arith.truncf %18 : vector<8x32xf32> to vector<8x32xbf16>
    %20 = vector.extract_strided_slice %14 {offsets = [0, 0], sizes = [8, 32], strides = [1, 1]} : vector<16x32xf32> to vector<8x32xf32>
    %21 = arith.truncf %20 : vector<8x32xf32> to vector<8x32xbf16>
    %22 = vector.extract_strided_slice %15 {offsets = [0, 0], sizes = [8, 32], strides = [1, 1]} : vector<16x32xf32> to vector<8x32xf32>
    %23 = arith.truncf %22 : vector<8x32xf32> to vector<8x32xbf16>
    %24 = vector.extract_strided_slice %19 {offsets = [0, 0], sizes = [8, 8], strides = [1, 1]} : vector<8x32xbf16> to vector<8x8xbf16>
    %25 = vector.extract_strided_slice %21 {offsets = [0, 0], sizes = [8, 8], strides = [1, 1]} : vector<8x32xbf16> to vector<8x8xbf16>
    %cst_10 = arith.constant dense<0.000000e+00> : vector<8x8xf32>
    %26 = tpu.matmul %24, %25, %cst_10 {dimension_numbers = #tpu.dot_dimension_numbers<[1], [1], [0], [0], [0, 0, 1, 0], [], []>} : vector<8x8xbf16>, vector<8x8xbf16>, vector<8x8xf32> -> vector<8x8xf32>
    %cst_11 = arith.constant 0.353553385 : f32
    %27 = vector.broadcast %cst_11 : f32 to vector<8x8xf32>
    %28 = arith.mulf %26, %27 : vector<8x8xf32>
    %cst_12 = arith.constant -1.000000e+30 : f32
    %29 = vector.broadcast %cst_12 : f32 to vector<8x8xf32>
    %30 = arith.select %2, %28, %29 : vector<8x8xi1>, vector<8x8xf32>
    %cst_13 = arith.constant dense<0xFF800000> : vector<8xf32>
    %31 = vector.multi_reduction <maximumf>, %30, %cst_13 [1] : vector<8x8xf32> to vector<8xf32>
    %32 = vector.shape_cast %31 : vector<8xf32> to vector<8x1xf32>
    %33 = vector.broadcast %32 : vector<8x1xf32> to vector<8x8xf32>
    %34 = arith.subf %30, %33 : vector<8x8xf32>
    %35 = math.exp %34 : vector<8x8xf32>
    %cst_14 = arith.constant dense<0.000000e+00> : vector<8xf32>
    %36 = vector.multi_reduction <add>, %35, %cst_14 [1] : vector<8x8xf32> to vector<8xf32>
    %37 = vector.shape_cast %36 : vector<8xf32> to vector<8x1xf32>
    %38 = vector.broadcast %37 : vector<8x1xf32> to vector<8x8xf32>
    %39 = arith.divf %35, %38 : vector<8x8xf32>
    %40 = arith.truncf %39 : vector<8x8xf32> to vector<8x8xbf16>
    %41 = vector.extract_strided_slice %23 {offsets = [0, 0], sizes = [8, 8], strides = [1, 1]} : vector<8x32xbf16> to vector<8x8xbf16>
    %cst_15 = arith.constant dense<0.000000e+00> : vector<8x8xf32>
    %42 = tpu.matmul %40, %41, %cst_15 {dimension_numbers = #tpu.dot_dimension_numbers<[1], [0], [0], [1], [0, 0, 1, 1], [], []>} : vector<8x8xbf16>, vector<8x8xbf16>, vector<8x8xf32> -> vector<8x8xf32>
    %43 = vector.extract_strided_slice %19 {offsets = [0, 8], sizes = [8, 8], strides = [1, 1]} : vector<8x32xbf16> to vector<8x8xbf16>
    %44 = vector.extract_strided_slice %21 {offsets = [0, 8], sizes = [8, 8], strides = [1, 1]} : vector<8x32xbf16> to vector<8x8xbf16>
    %cst_16 = arith.constant dense<0.000000e+00> : vector<8x8xf32>
    %45 = tpu.matmul %43, %44, %cst_16 {dimension_numbers = #tpu.dot_dimension_numbers<[1], [1], [0], [0], [0, 0, 1, 0], [], []>} : vector<8x8xbf16>, vector<8x8xbf16>, vector<8x8xf32> -> vector<8x8xf32>
    %cst_17 = arith.constant 0.353553385 : f32
    %46 = vector.broadcast %cst_17 : f32 to vector<8x8xf32>
    %47 = arith.mulf %45, %46 : vector<8x8xf32>
    %cst_18 = arith.constant -1.000000e+30 : f32
    %48 = vector.broadcast %cst_18 : f32 to vector<8x8xf32>
    %49 = arith.select %2, %47, %48 : vector<8x8xi1>, vector<8x8xf32>
    %cst_19 = arith.constant dense<0xFF800000> : vector<8xf32>
    %50 = vector.multi_reduction <maximumf>, %49, %cst_19 [1] : vector<8x8xf32> to vector<8xf32>
    %51 = vector.shape_cast %50 : vector<8xf32> to vector<8x1xf32>
    %52 = vector.broadcast %51 : vector<8x1xf32> to vector<8x8xf32>
    %53 = arith.subf %49, %52 : vector<8x8xf32>
    %54 = math.exp %53 : vector<8x8xf32>
    %cst_20 = arith.constant dense<0.000000e+00> : vector<8xf32>
    %55 = vector.multi_reduction <add>, %54, %cst_20 [1] : vector<8x8xf32> to vector<8xf32>
    %56 = vector.shape_cast %55 : vector<8xf32> to vector<8x1xf32>
    %57 = vector.broadcast %56 : vector<8x1xf32> to vector<8x8xf32>
    %58 = arith.divf %54, %57 : vector<8x8xf32>
    %59 = arith.truncf %58 : vector<8x8xf32> to vector<8x8xbf16>
    %60 = vector.extract_strided_slice %23 {offsets = [0, 8], sizes = [8, 8], strides = [1, 1]} : vector<8x32xbf16> to vector<8x8xbf16>
    %cst_21 = arith.constant dense<0.000000e+00> : vector<8x8xf32>
    %61 = tpu.matmul %59, %60, %cst_21 {dimension_numbers = #tpu.dot_dimension_numbers<[1], [0], [0], [1], [0, 0, 1, 1], [], []>} : vector<8x8xbf16>, vector<8x8xbf16>, vector<8x8xf32> -> vector<8x8xf32>
    %62 = vector.extract_strided_slice %19 {offsets = [0, 16], sizes = [8, 8], strides = [1, 1]} : vector<8x32xbf16> to vector<8x8xbf16>
    %63 = vector.extract_strided_slice %21 {offsets = [0, 16], sizes = [8, 8], strides = [1, 1]} : vector<8x32xbf16> to vector<8x8xbf16>
    %cst_22 = arith.constant dense<0.000000e+00> : vector<8x8xf32>
    %64 = tpu.matmul %62, %63, %cst_22 {dimension_numbers = #tpu.dot_dimension_numbers<[1], [1], [0], [0], [0, 0, 1, 0], [], []>} : vector<8x8xbf16>, vector<8x8xbf16>, vector<8x8xf32> -> vector<8x8xf32>
    %cst_23 = arith.constant 0.353553385 : f32
    %65 = vector.broadcast %cst_23 : f32 to vector<8x8xf32>
    %66 = arith.mulf %64, %65 : vector<8x8xf32>
    %cst_24 = arith.constant -1.000000e+30 : f32
    %67 = vector.broadcast %cst_24 : f32 to vector<8x8xf32>
    %68 = arith.select %2, %66, %67 : vector<8x8xi1>, vector<8x8xf32>
    %cst_25 = arith.constant dense<0xFF800000> : vector<8xf32>
    %69 = vector.multi_reduction <maximumf>, %68, %cst_25 [1] : vector<8x8xf32> to vector<8xf32>
    %70 = vector.shape_cast %69 : vector<8xf32> to vector<8x1xf32>
    %71 = vector.broadcast %70 : vector<8x1xf32> to vector<8x8xf32>
    %72 = arith.subf %68, %71 : vector<8x8xf32>
    %73 = math.exp %72 : vector<8x8xf32>
    %cst_26 = arith.constant dense<0.000000e+00> : vector<8xf32>
    %74 = vector.multi_reduction <add>, %73, %cst_26 [1] : vector<8x8xf32> to vector<8xf32>
    %75 = vector.shape_cast %74 : vector<8xf32> to vector<8x1xf32>
    %76 = vector.broadcast %75 : vector<8x1xf32> to vector<8x8xf32>
    %77 = arith.divf %73, %76 : vector<8x8xf32>
    %78 = arith.truncf %77 : vector<8x8xf32> to vector<8x8xbf16>
    %79 = vector.extract_strided_slice %23 {offsets = [0, 16], sizes = [8, 8], strides = [1, 1]} : vector<8x32xbf16> to vector<8x8xbf16>
    %cst_27 = arith.constant dense<0.000000e+00> : vector<8x8xf32>
    %80 = tpu.matmul %78, %79, %cst_27 {dimension_numbers = #tpu.dot_dimension_numbers<[1], [0], [0], [1], [0, 0, 1, 1], [], []>} : vector<8x8xbf16>, vector<8x8xbf16>, vector<8x8xf32> -> vector<8x8xf32>
    %81 = vector.extract_strided_slice %19 {offsets = [0, 24], sizes = [8, 8], strides = [1, 1]} : vector<8x32xbf16> to vector<8x8xbf16>
    %82 = vector.extract_strided_slice %21 {offsets = [0, 24], sizes = [8, 8], strides = [1, 1]} : vector<8x32xbf16> to vector<8x8xbf16>
    %cst_28 = arith.constant dense<0.000000e+00> : vector<8x8xf32>
    %83 = tpu.matmul %81, %82, %cst_28 {dimension_numbers = #tpu.dot_dimension_numbers<[1], [1], [0], [0], [0, 0, 1, 0], [], []>} : vector<8x8xbf16>, vector<8x8xbf16>, vector<8x8xf32> -> vector<8x8xf32>
    %cst_29 = arith.constant 0.353553385 : f32
    %84 = vector.broadcast %cst_29 : f32 to vector<8x8xf32>
    %85 = arith.mulf %83, %84 : vector<8x8xf32>
    %cst_30 = arith.constant -1.000000e+30 : f32
    %86 = vector.broadcast %cst_30 : f32 to vector<8x8xf32>
    %87 = arith.select %2, %85, %86 : vector<8x8xi1>, vector<8x8xf32>
    %cst_31 = arith.constant dense<0xFF800000> : vector<8xf32>
    %88 = vector.multi_reduction <maximumf>, %87, %cst_31 [1] : vector<8x8xf32> to vector<8xf32>
    %89 = vector.shape_cast %88 : vector<8xf32> to vector<8x1xf32>
    %90 = vector.broadcast %89 : vector<8x1xf32> to vector<8x8xf32>
    %91 = arith.subf %87, %90 : vector<8x8xf32>
    %92 = math.exp %91 : vector<8x8xf32>
    %cst_32 = arith.constant dense<0.000000e+00> : vector<8xf32>
    %93 = vector.multi_reduction <add>, %92, %cst_32 [1] : vector<8x8xf32> to vector<8xf32>
    %94 = vector.shape_cast %93 : vector<8xf32> to vector<8x1xf32>
    %95 = vector.broadcast %94 : vector<8x1xf32> to vector<8x8xf32>
    %96 = arith.divf %92, %95 : vector<8x8xf32>
    %97 = arith.truncf %96 : vector<8x8xf32> to vector<8x8xbf16>
    %98 = vector.extract_strided_slice %23 {offsets = [0, 24], sizes = [8, 8], strides = [1, 1]} : vector<8x32xbf16> to vector<8x8xbf16>
    %cst_33 = arith.constant dense<0.000000e+00> : vector<8x8xf32>
    %99 = tpu.matmul %97, %98, %cst_33 {dimension_numbers = #tpu.dot_dimension_numbers<[1], [0], [0], [1], [0, 0, 1, 1], [], []>} : vector<8x8xbf16>, vector<8x8xbf16>, vector<8x8xf32> -> vector<8x8xf32>
    %100 = tpu.concatenate %42, %61, %80, %99 in 1 : vector<8x8xf32>, vector<8x8xf32>, vector<8x8xf32>, vector<8x8xf32> -> vector<8x32xf32>
    %101 = arith.truncf %100 : vector<8x32xf32> to vector<8x32xbf16>
    %cst_34 = arith.constant dense<0.000000e+00> : vector<8x32xf32>
    %102 = tpu.matmul %101, %16, %cst_34 {dimension_numbers = #tpu.dot_dimension_numbers<[1], [0], [0], [1], [0, 0, 1, 1], [], []>} : vector<8x32xbf16>, vector<32x32xbf16>, vector<8x32xf32> -> vector<8x32xf32>
    %103 = vector.extract_strided_slice %13 {offsets = [8, 0], sizes = [8, 32], strides = [1, 1]} : vector<16x32xf32> to vector<8x32xf32>
    %104 = arith.truncf %103 : vector<8x32xf32> to vector<8x32xbf16>
    %105 = vector.extract_strided_slice %14 {offsets = [8, 0], sizes = [8, 32], strides = [1, 1]} : vector<16x32xf32> to vector<8x32xf32>
    %106 = arith.truncf %105 : vector<8x32xf32> to vector<8x32xbf16>
    %107 = vector.extract_strided_slice %15 {offsets = [8, 0], sizes = [8, 32], strides = [1, 1]} : vector<16x32xf32> to vector<8x32xf32>
    %108 = arith.truncf %107 : vector<8x32xf32> to vector<8x32xbf16>
    %109 = vector.extract_strided_slice %104 {offsets = [0, 0], sizes = [8, 8], strides = [1, 1]} : vector<8x32xbf16> to vector<8x8xbf16>
    %110 = vector.extract_strided_slice %106 {offsets = [0, 0], sizes = [8, 8], strides = [1, 1]} : vector<8x32xbf16> to vector<8x8xbf16>
    %cst_35 = arith.constant dense<0.000000e+00> : vector<8x8xf32>
    %111 = tpu.matmul %109, %110, %cst_35 {dimension_numbers = #tpu.dot_dimension_numbers<[1], [1], [0], [0], [0, 0, 1, 0], [], []>} : vector<8x8xbf16>, vector<8x8xbf16>, vector<8x8xf32> -> vector<8x8xf32>
    %cst_36 = arith.constant 0.353553385 : f32
    %112 = vector.broadcast %cst_36 : f32 to vector<8x8xf32>
    %113 = arith.mulf %111, %112 : vector<8x8xf32>
    %cst_37 = arith.constant -1.000000e+30 : f32
    %114 = vector.broadcast %cst_37 : f32 to vector<8x8xf32>
    %115 = arith.select %2, %113, %114 : vector<8x8xi1>, vector<8x8xf32>
    %cst_38 = arith.constant dense<0xFF800000> : vector<8xf32>
    %116 = vector.multi_reduction <maximumf>, %115, %cst_38 [1] : vector<8x8xf32> to vector<8xf32>
    %117 = vector.shape_cast %116 : vector<8xf32> to vector<8x1xf32>
    %118 = vector.broadcast %117 : vector<8x1xf32> to vector<8x8xf32>
    %119 = arith.subf %115, %118 : vector<8x8xf32>
    %120 = math.exp %119 : vector<8x8xf32>
    %cst_39 = arith.constant dense<0.000000e+00> : vector<8xf32>
    %121 = vector.multi_reduction <add>, %120, %cst_39 [1] : vector<8x8xf32> to vector<8xf32>
    %122 = vector.shape_cast %121 : vector<8xf32> to vector<8x1xf32>
    %123 = vector.broadcast %122 : vector<8x1xf32> to vector<8x8xf32>
    %124 = arith.divf %120, %123 : vector<8x8xf32>
    %125 = arith.truncf %124 : vector<8x8xf32> to vector<8x8xbf16>
    %126 = vector.extract_strided_slice %108 {offsets = [0, 0], sizes = [8, 8], strides = [1, 1]} : vector<8x32xbf16> to vector<8x8xbf16>
    %cst_40 = arith.constant dense<0.000000e+00> : vector<8x8xf32>
    %127 = tpu.matmul %125, %126, %cst_40 {dimension_numbers = #tpu.dot_dimension_numbers<[1], [0], [0], [1], [0, 0, 1, 1], [], []>} : vector<8x8xbf16>, vector<8x8xbf16>, vector<8x8xf32> -> vector<8x8xf32>
    %128 = vector.extract_strided_slice %104 {offsets = [0, 8], sizes = [8, 8], strides = [1, 1]} : vector<8x32xbf16> to vector<8x8xbf16>
    %129 = vector.extract_strided_slice %106 {offsets = [0, 8], sizes = [8, 8], strides = [1, 1]} : vector<8x32xbf16> to vector<8x8xbf16>
    %cst_41 = arith.constant dense<0.000000e+00> : vector<8x8xf32>
    %130 = tpu.matmul %128, %129, %cst_41 {dimension_numbers = #tpu.dot_dimension_numbers<[1], [1], [0], [0], [0, 0, 1, 0], [], []>} : vector<8x8xbf16>, vector<8x8xbf16>, vector<8x8xf32> -> vector<8x8xf32>
    %cst_42 = arith.constant 0.353553385 : f32
    %131 = vector.broadcast %cst_42 : f32 to vector<8x8xf32>
    %132 = arith.mulf %130, %131 : vector<8x8xf32>
    %cst_43 = arith.constant -1.000000e+30 : f32
    %133 = vector.broadcast %cst_43 : f32 to vector<8x8xf32>
    %134 = arith.select %2, %132, %133 : vector<8x8xi1>, vector<8x8xf32>
    %cst_44 = arith.constant dense<0xFF800000> : vector<8xf32>
    %135 = vector.multi_reduction <maximumf>, %134, %cst_44 [1] : vector<8x8xf32> to vector<8xf32>
    %136 = vector.shape_cast %135 : vector<8xf32> to vector<8x1xf32>
    %137 = vector.broadcast %136 : vector<8x1xf32> to vector<8x8xf32>
    %138 = arith.subf %134, %137 : vector<8x8xf32>
    %139 = math.exp %138 : vector<8x8xf32>
    %cst_45 = arith.constant dense<0.000000e+00> : vector<8xf32>
    %140 = vector.multi_reduction <add>, %139, %cst_45 [1] : vector<8x8xf32> to vector<8xf32>
    %141 = vector.shape_cast %140 : vector<8xf32> to vector<8x1xf32>
    %142 = vector.broadcast %141 : vector<8x1xf32> to vector<8x8xf32>
    %143 = arith.divf %139, %142 : vector<8x8xf32>
    %144 = arith.truncf %143 : vector<8x8xf32> to vector<8x8xbf16>
    %145 = vector.extract_strided_slice %108 {offsets = [0, 8], sizes = [8, 8], strides = [1, 1]} : vector<8x32xbf16> to vector<8x8xbf16>
    %cst_46 = arith.constant dense<0.000000e+00> : vector<8x8xf32>
    %146 = tpu.matmul %144, %145, %cst_46 {dimension_numbers = #tpu.dot_dimension_numbers<[1], [0], [0], [1], [0, 0, 1, 1], [], []>} : vector<8x8xbf16>, vector<8x8xbf16>, vector<8x8xf32> -> vector<8x8xf32>
    %147 = vector.extract_strided_slice %104 {offsets = [0, 16], sizes = [8, 8], strides = [1, 1]} : vector<8x32xbf16> to vector<8x8xbf16>
    %148 = vector.extract_strided_slice %106 {offsets = [0, 16], sizes = [8, 8], strides = [1, 1]} : vector<8x32xbf16> to vector<8x8xbf16>
    %cst_47 = arith.constant dense<0.000000e+00> : vector<8x8xf32>
    %149 = tpu.matmul %147, %148, %cst_47 {dimension_numbers = #tpu.dot_dimension_numbers<[1], [1], [0], [0], [0, 0, 1, 0], [], []>} : vector<8x8xbf16>, vector<8x8xbf16>, vector<8x8xf32> -> vector<8x8xf32>
    %cst_48 = arith.constant 0.353553385 : f32
    %150 = vector.broadcast %cst_48 : f32 to vector<8x8xf32>
    %151 = arith.mulf %149, %150 : vector<8x8xf32>
    %cst_49 = arith.constant -1.000000e+30 : f32
    %152 = vector.broadcast %cst_49 : f32 to vector<8x8xf32>
    %153 = arith.select %2, %151, %152 : vector<8x8xi1>, vector<8x8xf32>
    %cst_50 = arith.constant dense<0xFF800000> : vector<8xf32>
    %154 = vector.multi_reduction <maximumf>, %153, %cst_50 [1] : vector<8x8xf32> to vector<8xf32>
    %155 = vector.shape_cast %154 : vector<8xf32> to vector<8x1xf32>
    %156 = vector.broadcast %155 : vector<8x1xf32> to vector<8x8xf32>
    %157 = arith.subf %153, %156 : vector<8x8xf32>
    %158 = math.exp %157 : vector<8x8xf32>
    %cst_51 = arith.constant dense<0.000000e+00> : vector<8xf32>
    %159 = vector.multi_reduction <add>, %158, %cst_51 [1] : vector<8x8xf32> to vector<8xf32>
    %160 = vector.shape_cast %159 : vector<8xf32> to vector<8x1xf32>
    %161 = vector.broadcast %160 : vector<8x1xf32> to vector<8x8xf32>
    %162 = arith.divf %158, %161 : vector<8x8xf32>
    %163 = arith.truncf %162 : vector<8x8xf32> to vector<8x8xbf16>
    %164 = vector.extract_strided_slice %108 {offsets = [0, 16], sizes = [8, 8], strides = [1, 1]} : vector<8x32xbf16> to vector<8x8xbf16>
    %cst_52 = arith.constant dense<0.000000e+00> : vector<8x8xf32>
    %165 = tpu.matmul %163, %164, %cst_52 {dimension_numbers = #tpu.dot_dimension_numbers<[1], [0], [0], [1], [0, 0, 1, 1], [], []>} : vector<8x8xbf16>, vector<8x8xbf16>, vector<8x8xf32> -> vector<8x8xf32>
    %166 = vector.extract_strided_slice %104 {offsets = [0, 24], sizes = [8, 8], strides = [1, 1]} : vector<8x32xbf16> to vector<8x8xbf16>
    %167 = vector.extract_strided_slice %106 {offsets = [0, 24], sizes = [8, 8], strides = [1, 1]} : vector<8x32xbf16> to vector<8x8xbf16>
    %cst_53 = arith.constant dense<0.000000e+00> : vector<8x8xf32>
    %168 = tpu.matmul %166, %167, %cst_53 {dimension_numbers = #tpu.dot_dimension_numbers<[1], [1], [0], [0], [0, 0, 1, 0], [], []>} : vector<8x8xbf16>, vector<8x8xbf16>, vector<8x8xf32> -> vector<8x8xf32>
    %cst_54 = arith.constant 0.353553385 : f32
    %169 = vector.broadcast %cst_54 : f32 to vector<8x8xf32>
    %170 = arith.mulf %168, %169 : vector<8x8xf32>
    %cst_55 = arith.constant -1.000000e+30 : f32
    %171 = vector.broadcast %cst_55 : f32 to vector<8x8xf32>
    %172 = arith.select %2, %170, %171 : vector<8x8xi1>, vector<8x8xf32>
    %cst_56 = arith.constant dense<0xFF800000> : vector<8xf32>
    %173 = vector.multi_reduction <maximumf>, %172, %cst_56 [1] : vector<8x8xf32> to vector<8xf32>
    %174 = vector.shape_cast %173 : vector<8xf32> to vector<8x1xf32>
    %175 = vector.broadcast %174 : vector<8x1xf32> to vector<8x8xf32>
    %176 = arith.subf %172, %175 : vector<8x8xf32>
    %177 = math.exp %176 : vector<8x8xf32>
    %cst_57 = arith.constant dense<0.000000e+00> : vector<8xf32>
    %178 = vector.multi_reduction <add>, %177, %cst_57 [1] : vector<8x8xf32> to vector<8xf32>
    %179 = vector.shape_cast %178 : vector<8xf32> to vector<8x1xf32>
    %180 = vector.broadcast %179 : vector<8x1xf32> to vector<8x8xf32>
    %181 = arith.divf %177, %180 : vector<8x8xf32>
    %182 = arith.truncf %181 : vector<8x8xf32> to vector<8x8xbf16>
    %183 = vector.extract_strided_slice %108 {offsets = [0, 24], sizes = [8, 8], strides = [1, 1]} : vector<8x32xbf16> to vector<8x8xbf16>
    %cst_58 = arith.constant dense<0.000000e+00> : vector<8x8xf32>
    %184 = tpu.matmul %182, %183, %cst_58 {dimension_numbers = #tpu.dot_dimension_numbers<[1], [0], [0], [1], [0, 0, 1, 1], [], []>} : vector<8x8xbf16>, vector<8x8xbf16>, vector<8x8xf32> -> vector<8x8xf32>
    %185 = tpu.concatenate %127, %146, %165, %184 in 1 : vector<8x8xf32>, vector<8x8xf32>, vector<8x8xf32>, vector<8x8xf32> -> vector<8x32xf32>
    %186 = arith.truncf %185 : vector<8x32xf32> to vector<8x32xbf16>
    %cst_59 = arith.constant dense<0.000000e+00> : vector<8x32xf32>
    %187 = tpu.matmul %186, %16, %cst_59 {dimension_numbers = #tpu.dot_dimension_numbers<[1], [0], [0], [1], [0, 0, 1, 1], [], []>} : vector<8x32xbf16>, vector<32x32xbf16>, vector<8x32xf32> -> vector<8x32xf32>
    %188 = tpu.concatenate %102, %187 in 0 : vector<8x32xf32>, vector<8x32xf32> -> vector<16x32xf32>
    %189 = vector.broadcast %17 : vector<1x32xf32> to vector<16x32xf32>
    %190 = arith.addf %188, %189 : vector<16x32xf32>
    %191 = arith.addf %6, %190 : vector<16x32xf32>
    %cst_60 = arith.constant dense<0.000000e+00> : vector<16xf32>
    %192 = vector.multi_reduction <add>, %191, %cst_60 [1] : vector<16x32xf32> to vector<16xf32>
    %193 = vector.shape_cast %192 : vector<16xf32> to vector<16x1xf32>
    %cst_61 = arith.constant 3.200000e+01 : f32
    %194 = vector.broadcast %cst_61 : f32 to vector<16x1xf32>
    %195 = arith.divf %193, %194 : vector<16x1xf32>
    %196 = vector.broadcast %195 : vector<16x1xf32> to vector<16x32xf32>
    %197 = arith.subf %191, %196 : vector<16x32xf32>
    %198 = arith.mulf %197, %197 : vector<16x32xf32>
    %cst_62 = arith.constant dense<0.000000e+00> : vector<16xf32>
    %199 = vector.multi_reduction <add>, %198, %cst_62 [1] : vector<16x32xf32> to vector<16xf32>
    %200 = vector.shape_cast %199 : vector<16xf32> to vector<16x1xf32>
    %cst_63 = arith.constant 3.200000e+01 : f32
    %201 = vector.broadcast %cst_63 : f32 to vector<16x1xf32>
    %202 = arith.divf %200, %201 : vector<16x1xf32>
    %203 = vector.broadcast %195 : vector<16x1xf32> to vector<16x32xf32>
    %204 = arith.subf %191, %203 : vector<16x32xf32>
    %cst_64 = arith.constant 9.99999974E-6 : f32
    %205 = vector.broadcast %cst_64 : f32 to vector<16x1xf32>
    %206 = arith.addf %202, %205 : vector<16x1xf32>
    %207 = math.rsqrt %206 : vector<16x1xf32>
    %208 = vector.broadcast %207 : vector<16x1xf32> to vector<16x32xf32>
    %209 = arith.mulf %204, %208 : vector<16x32xf32>
    %c23 = arith.constant 23 : index
    %c0_65 = arith.constant 0 : index
    %210 = vector.load %arg5[%c23, %c0_65] : memref<32x128xf32, #tpu.memory_space<vmem>>, vector<1x32xf32>
    %211 = vector.broadcast %210 : vector<1x32xf32> to vector<16x32xf32>
    %212 = arith.mulf %209, %211 : vector<16x32xf32>
    %c24 = arith.constant 24 : index
    %c0_66 = arith.constant 0 : index
    %213 = vector.load %arg5[%c24, %c0_66] : memref<32x128xf32, #tpu.memory_space<vmem>>, vector<1x32xf32>
    %214 = vector.broadcast %213 : vector<1x32xf32> to vector<16x32xf32>
    %215 = arith.addf %212, %214 : vector<16x32xf32>
    %c0_67 = arith.constant 0 : index
    %c256 = arith.constant 256 : index
    %216 = vector.load %arg3[%c0_67, %c256] : memref<32x768xbf16, #tpu.memory_space<vmem>>, vector<32x32xbf16>
    %217 = arith.truncf %215 : vector<16x32xf32> to vector<16x32xbf16>
    %cst_68 = arith.constant dense<0.000000e+00> : vector<16x32xf32>
    %218 = tpu.matmul %217, %216, %cst_68 {dimension_numbers = #tpu.dot_dimension_numbers<[1], [0], [0], [1], [0, 0, 1, 1], [], []>} : vector<16x32xbf16>, vector<32x32xbf16>, vector<16x32xf32> -> vector<16x32xf32>
    %c18 = arith.constant 18 : index
    %c0_69 = arith.constant 0 : index
    %219 = vector.load %arg5[%c18, %c0_69] : memref<32x128xf32, #tpu.memory_space<vmem>>, vector<1x32xf32>
    %220 = vector.broadcast %219 : vector<1x32xf32> to vector<16x32xf32>
    %221 = arith.addf %218, %220 : vector<16x32xf32>
    %c0_70 = arith.constant 0 : index
    %c384 = arith.constant 384 : index
    %222 = vector.load %arg3[%c0_70, %c384] : memref<32x768xbf16, #tpu.memory_space<vmem>>, vector<32x64xbf16>
    %223 = arith.truncf %4 : vector<32x32xf32> to vector<32x32xbf16>
    %cst_71 = arith.constant dense<0.000000e+00> : vector<32x64xf32>
    %224 = tpu.matmul %223, %222, %cst_71 {dimension_numbers = #tpu.dot_dimension_numbers<[1], [0], [0], [1], [0, 0, 1, 1], [], []>} : vector<32x32xbf16>, vector<32x64xbf16>, vector<32x64xf32> -> vector<32x64xf32>
    %c19 = arith.constant 19 : index
    %c0_72 = arith.constant 0 : index
    %225 = vector.load %arg5[%c19, %c0_72] : memref<32x128xf32, #tpu.memory_space<vmem>>, vector<1x64xf32>
    %226 = vector.broadcast %225 : vector<1x64xf32> to vector<32x64xf32>
    %227 = arith.addf %224, %226 : vector<32x64xf32>
    %228 = vector.extract_strided_slice %227 {offsets = [0, 0], sizes = [32, 32], strides = [1, 1]} : vector<32x64xf32> to vector<32x32xf32>
    %229 = vector.extract_strided_slice %227 {offsets = [0, 32], sizes = [32, 32], strides = [1, 1]} : vector<32x64xf32> to vector<32x32xf32>
    %c0_73 = arith.constant 0 : index
    %c512 = arith.constant 512 : index
    %230 = vector.load %arg3[%c0_73, %c512] : memref<32x768xbf16, #tpu.memory_space<vmem>>, vector<32x32xbf16>
    %c20 = arith.constant 20 : index
    %c0_74 = arith.constant 0 : index
    %231 = vector.load %arg5[%c20, %c0_74] : memref<32x128xf32, #tpu.memory_space<vmem>>, vector<1x32xf32>
    %232 = vector.extract_strided_slice %221 {offsets = [0, 0], sizes = [8, 32], strides = [1, 1]} : vector<16x32xf32> to vector<8x32xf32>
    %233 = arith.truncf %232 : vector<8x32xf32> to vector<8x32xbf16>
    %234 = vector.extract_strided_slice %228 {offsets = [0, 0], sizes = [16, 32], strides = [1, 1]} : vector<32x32xf32> to vector<16x32xf32>
    %235 = arith.truncf %234 : vector<16x32xf32> to vector<16x32xbf16>
    %236 = vector.extract_strided_slice %229 {offsets = [0, 0], sizes = [16, 32], strides = [1, 1]} : vector<32x32xf32> to vector<16x32xf32>
    %237 = arith.truncf %236 : vector<16x32xf32> to vector<16x32xbf16>
    %238 = vector.extract_strided_slice %233 {offsets = [0, 0], sizes = [8, 8], strides = [1, 1]} : vector<8x32xbf16> to vector<8x8xbf16>
    %239 = vector.extract_strided_slice %235 {offsets = [0, 0], sizes = [16, 8], strides = [1, 1]} : vector<16x32xbf16> to vector<16x8xbf16>
    %cst_75 = arith.constant dense<0.000000e+00> : vector<8x16xf32>
    %240 = tpu.matmul %238, %239, %cst_75 {dimension_numbers = #tpu.dot_dimension_numbers<[1], [1], [0], [0], [0, 0, 1, 0], [], []>} : vector<8x8xbf16>, vector<16x8xbf16>, vector<8x16xf32> -> vector<8x16xf32>
    %cst_76 = arith.constant 0.353553385 : f32
    %241 = vector.broadcast %cst_76 : f32 to vector<8x16xf32>
    %242 = arith.mulf %240, %241 : vector<8x16xf32>
    %cst_77 = arith.constant dense<0xFF800000> : vector<8xf32>
    %243 = vector.multi_reduction <maximumf>, %242, %cst_77 [1] : vector<8x16xf32> to vector<8xf32>
    %244 = vector.shape_cast %243 : vector<8xf32> to vector<8x1xf32>
    %245 = vector.broadcast %244 : vector<8x1xf32> to vector<8x16xf32>
    %246 = arith.subf %242, %245 : vector<8x16xf32>
    %247 = math.exp %246 : vector<8x16xf32>
    %cst_78 = arith.constant dense<0.000000e+00> : vector<8xf32>
    %248 = vector.multi_reduction <add>, %247, %cst_78 [1] : vector<8x16xf32> to vector<8xf32>
    %249 = vector.shape_cast %248 : vector<8xf32> to vector<8x1xf32>
    %250 = vector.broadcast %249 : vector<8x1xf32> to vector<8x16xf32>
    %251 = arith.divf %247, %250 : vector<8x16xf32>
    %252 = arith.truncf %251 : vector<8x16xf32> to vector<8x16xbf16>
    %253 = vector.extract_strided_slice %237 {offsets = [0, 0], sizes = [16, 8], strides = [1, 1]} : vector<16x32xbf16> to vector<16x8xbf16>
    %cst_79 = arith.constant dense<0.000000e+00> : vector<8x8xf32>
    %254 = tpu.matmul %252, %253, %cst_79 {dimension_numbers = #tpu.dot_dimension_numbers<[1], [0], [0], [1], [0, 0, 1, 1], [], []>} : vector<8x16xbf16>, vector<16x8xbf16>, vector<8x8xf32> -> vector<8x8xf32>
    %255 = vector.extract_strided_slice %233 {offsets = [0, 8], sizes = [8, 8], strides = [1, 1]} : vector<8x32xbf16> to vector<8x8xbf16>
    %256 = vector.extract_strided_slice %235 {offsets = [0, 8], sizes = [16, 8], strides = [1, 1]} : vector<16x32xbf16> to vector<16x8xbf16>
    %cst_80 = arith.constant dense<0.000000e+00> : vector<8x16xf32>
    %257 = tpu.matmul %255, %256, %cst_80 {dimension_numbers = #tpu.dot_dimension_numbers<[1], [1], [0], [0], [0, 0, 1, 0], [], []>} : vector<8x8xbf16>, vector<16x8xbf16>, vector<8x16xf32> -> vector<8x16xf32>
    %cst_81 = arith.constant 0.353553385 : f32
    %258 = vector.broadcast %cst_81 : f32 to vector<8x16xf32>
    %259 = arith.mulf %257, %258 : vector<8x16xf32>
    %cst_82 = arith.constant dense<0xFF800000> : vector<8xf32>
    %260 = vector.multi_reduction <maximumf>, %259, %cst_82 [1] : vector<8x16xf32> to vector<8xf32>
    %261 = vector.shape_cast %260 : vector<8xf32> to vector<8x1xf32>
    %262 = vector.broadcast %261 : vector<8x1xf32> to vector<8x16xf32>
    %263 = arith.subf %259, %262 : vector<8x16xf32>
    %264 = math.exp %263 : vector<8x16xf32>
    %cst_83 = arith.constant dense<0.000000e+00> : vector<8xf32>
    %265 = vector.multi_reduction <add>, %264, %cst_83 [1] : vector<8x16xf32> to vector<8xf32>
    %266 = vector.shape_cast %265 : vector<8xf32> to vector<8x1xf32>
    %267 = vector.broadcast %266 : vector<8x1xf32> to vector<8x16xf32>
    %268 = arith.divf %264, %267 : vector<8x16xf32>
    %269 = arith.truncf %268 : vector<8x16xf32> to vector<8x16xbf16>
    %270 = vector.extract_strided_slice %237 {offsets = [0, 8], sizes = [16, 8], strides = [1, 1]} : vector<16x32xbf16> to vector<16x8xbf16>
    %cst_84 = arith.constant dense<0.000000e+00> : vector<8x8xf32>
    %271 = tpu.matmul %269, %270, %cst_84 {dimension_numbers = #tpu.dot_dimension_numbers<[1], [0], [0], [1], [0, 0, 1, 1], [], []>} : vector<8x16xbf16>, vector<16x8xbf16>, vector<8x8xf32> -> vector<8x8xf32>
    %272 = vector.extract_strided_slice %233 {offsets = [0, 16], sizes = [8, 8], strides = [1, 1]} : vector<8x32xbf16> to vector<8x8xbf16>
    %273 = vector.extract_strided_slice %235 {offsets = [0, 16], sizes = [16, 8], strides = [1, 1]} : vector<16x32xbf16> to vector<16x8xbf16>
    %cst_85 = arith.constant dense<0.000000e+00> : vector<8x16xf32>
    %274 = tpu.matmul %272, %273, %cst_85 {dimension_numbers = #tpu.dot_dimension_numbers<[1], [1], [0], [0], [0, 0, 1, 0], [], []>} : vector<8x8xbf16>, vector<16x8xbf16>, vector<8x16xf32> -> vector<8x16xf32>
    %cst_86 = arith.constant 0.353553385 : f32
    %275 = vector.broadcast %cst_86 : f32 to vector<8x16xf32>
    %276 = arith.mulf %274, %275 : vector<8x16xf32>
    %cst_87 = arith.constant dense<0xFF800000> : vector<8xf32>
    %277 = vector.multi_reduction <maximumf>, %276, %cst_87 [1] : vector<8x16xf32> to vector<8xf32>
    %278 = vector.shape_cast %277 : vector<8xf32> to vector<8x1xf32>
    %279 = vector.broadcast %278 : vector<8x1xf32> to vector<8x16xf32>
    %280 = arith.subf %276, %279 : vector<8x16xf32>
    %281 = math.exp %280 : vector<8x16xf32>
    %cst_88 = arith.constant dense<0.000000e+00> : vector<8xf32>
    %282 = vector.multi_reduction <add>, %281, %cst_88 [1] : vector<8x16xf32> to vector<8xf32>
    %283 = vector.shape_cast %282 : vector<8xf32> to vector<8x1xf32>
    %284 = vector.broadcast %283 : vector<8x1xf32> to vector<8x16xf32>
    %285 = arith.divf %281, %284 : vector<8x16xf32>
    %286 = arith.truncf %285 : vector<8x16xf32> to vector<8x16xbf16>
    %287 = vector.extract_strided_slice %237 {offsets = [0, 16], sizes = [16, 8], strides = [1, 1]} : vector<16x32xbf16> to vector<16x8xbf16>
    %cst_89 = arith.constant dense<0.000000e+00> : vector<8x8xf32>
    %288 = tpu.matmul %286, %287, %cst_89 {dimension_numbers = #tpu.dot_dimension_numbers<[1], [0], [0], [1], [0, 0, 1, 1], [], []>} : vector<8x16xbf16>, vector<16x8xbf16>, vector<8x8xf32> -> vector<8x8xf32>
    %289 = vector.extract_strided_slice %233 {offsets = [0, 24], sizes = [8, 8], strides = [1, 1]} : vector<8x32xbf16> to vector<8x8xbf16>
    %290 = vector.extract_strided_slice %235 {offsets = [0, 24], sizes = [16, 8], strides = [1, 1]} : vector<16x32xbf16> to vector<16x8xbf16>
    %cst_90 = arith.constant dense<0.000000e+00> : vector<8x16xf32>
    %291 = tpu.matmul %289, %290, %cst_90 {dimension_numbers = #tpu.dot_dimension_numbers<[1], [1], [0], [0], [0, 0, 1, 0], [], []>} : vector<8x8xbf16>, vector<16x8xbf16>, vector<8x16xf32> -> vector<8x16xf32>
    %cst_91 = arith.constant 0.353553385 : f32
    %292 = vector.broadcast %cst_91 : f32 to vector<8x16xf32>
    %293 = arith.mulf %291, %292 : vector<8x16xf32>
    %cst_92 = arith.constant dense<0xFF800000> : vector<8xf32>
    %294 = vector.multi_reduction <maximumf>, %293, %cst_92 [1] : vector<8x16xf32> to vector<8xf32>
    %295 = vector.shape_cast %294 : vector<8xf32> to vector<8x1xf32>
    %296 = vector.broadcast %295 : vector<8x1xf32> to vector<8x16xf32>
    %297 = arith.subf %293, %296 : vector<8x16xf32>
    %298 = math.exp %297 : vector<8x16xf32>
    %cst_93 = arith.constant dense<0.000000e+00> : vector<8xf32>
    %299 = vector.multi_reduction <add>, %298, %cst_93 [1] : vector<8x16xf32> to vector<8xf32>
    %300 = vector.shape_cast %299 : vector<8xf32> to vector<8x1xf32>
    %301 = vector.broadcast %300 : vector<8x1xf32> to vector<8x16xf32>
    %302 = arith.divf %298, %301 : vector<8x16xf32>
    %303 = arith.truncf %302 : vector<8x16xf32> to vector<8x16xbf16>
    %304 = vector.extract_strided_slice %237 {offsets = [0, 24], sizes = [16, 8], strides = [1, 1]} : vector<16x32xbf16> to vector<16x8xbf16>
    %cst_94 = arith.constant dense<0.000000e+00> : vector<8x8xf32>
    %305 = tpu.matmul %303, %304, %cst_94 {dimension_numbers = #tpu.dot_dimension_numbers<[1], [0], [0], [1], [0, 0, 1, 1], [], []>} : vector<8x16xbf16>, vector<16x8xbf16>, vector<8x8xf32> -> vector<8x8xf32>
    %306 = tpu.concatenate %254, %271, %288, %305 in 1 : vector<8x8xf32>, vector<8x8xf32>, vector<8x8xf32>, vector<8x8xf32> -> vector<8x32xf32>
    %307 = arith.truncf %306 : vector<8x32xf32> to vector<8x32xbf16>
    %cst_95 = arith.constant dense<0.000000e+00> : vector<8x32xf32>
    %308 = tpu.matmul %307, %230, %cst_95 {dimension_numbers = #tpu.dot_dimension_numbers<[1], [0], [0], [1], [0, 0, 1, 1], [], []>} : vector<8x32xbf16>, vector<32x32xbf16>, vector<8x32xf32> -> vector<8x32xf32>
    %309 = vector.extract_strided_slice %221 {offsets = [8, 0], sizes = [8, 32], strides = [1, 1]} : vector<16x32xf32> to vector<8x32xf32>
    %310 = arith.truncf %309 : vector<8x32xf32> to vector<8x32xbf16>
    %311 = vector.extract_strided_slice %228 {offsets = [16, 0], sizes = [16, 32], strides = [1, 1]} : vector<32x32xf32> to vector<16x32xf32>
    %312 = arith.truncf %311 : vector<16x32xf32> to vector<16x32xbf16>
    %313 = vector.extract_strided_slice %229 {offsets = [16, 0], sizes = [16, 32], strides = [1, 1]} : vector<32x32xf32> to vector<16x32xf32>
    %314 = arith.truncf %313 : vector<16x32xf32> to vector<16x32xbf16>
    %315 = vector.extract_strided_slice %310 {offsets = [0, 0], sizes = [8, 8], strides = [1, 1]} : vector<8x32xbf16> to vector<8x8xbf16>
    %316 = vector.extract_strided_slice %312 {offsets = [0, 0], sizes = [16, 8], strides = [1, 1]} : vector<16x32xbf16> to vector<16x8xbf16>
    %cst_96 = arith.constant dense<0.000000e+00> : vector<8x16xf32>
    %317 = tpu.matmul %315, %316, %cst_96 {dimension_numbers = #tpu.dot_dimension_numbers<[1], [1], [0], [0], [0, 0, 1, 0], [], []>} : vector<8x8xbf16>, vector<16x8xbf16>, vector<8x16xf32> -> vector<8x16xf32>
    %cst_97 = arith.constant 0.353553385 : f32
    %318 = vector.broadcast %cst_97 : f32 to vector<8x16xf32>
    %319 = arith.mulf %317, %318 : vector<8x16xf32>
    %cst_98 = arith.constant dense<0xFF800000> : vector<8xf32>
    %320 = vector.multi_reduction <maximumf>, %319, %cst_98 [1] : vector<8x16xf32> to vector<8xf32>
    %321 = vector.shape_cast %320 : vector<8xf32> to vector<8x1xf32>
    %322 = vector.broadcast %321 : vector<8x1xf32> to vector<8x16xf32>
    %323 = arith.subf %319, %322 : vector<8x16xf32>
    %324 = math.exp %323 : vector<8x16xf32>
    %cst_99 = arith.constant dense<0.000000e+00> : vector<8xf32>
    %325 = vector.multi_reduction <add>, %324, %cst_99 [1] : vector<8x16xf32> to vector<8xf32>
    %326 = vector.shape_cast %325 : vector<8xf32> to vector<8x1xf32>
    %327 = vector.broadcast %326 : vector<8x1xf32> to vector<8x16xf32>
    %328 = arith.divf %324, %327 : vector<8x16xf32>
    %329 = arith.truncf %328 : vector<8x16xf32> to vector<8x16xbf16>
    %330 = vector.extract_strided_slice %314 {offsets = [0, 0], sizes = [16, 8], strides = [1, 1]} : vector<16x32xbf16> to vector<16x8xbf16>
    %cst_100 = arith.constant dense<0.000000e+00> : vector<8x8xf32>
    %331 = tpu.matmul %329, %330, %cst_100 {dimension_numbers = #tpu.dot_dimension_numbers<[1], [0], [0], [1], [0, 0, 1, 1], [], []>} : vector<8x16xbf16>, vector<16x8xbf16>, vector<8x8xf32> -> vector<8x8xf32>
    %332 = vector.extract_strided_slice %310 {offsets = [0, 8], sizes = [8, 8], strides = [1, 1]} : vector<8x32xbf16> to vector<8x8xbf16>
    %333 = vector.extract_strided_slice %312 {offsets = [0, 8], sizes = [16, 8], strides = [1, 1]} : vector<16x32xbf16> to vector<16x8xbf16>
    %cst_101 = arith.constant dense<0.000000e+00> : vector<8x16xf32>
    %334 = tpu.matmul %332, %333, %cst_101 {dimension_numbers = #tpu.dot_dimension_numbers<[1], [1], [0], [0], [0, 0, 1, 0], [], []>} : vector<8x8xbf16>, vector<16x8xbf16>, vector<8x16xf32> -> vector<8x16xf32>
    %cst_102 = arith.constant 0.353553385 : f32
    %335 = vector.broadcast %cst_102 : f32 to vector<8x16xf32>
    %336 = arith.mulf %334, %335 : vector<8x16xf32>
    %cst_103 = arith.constant dense<0xFF800000> : vector<8xf32>
    %337 = vector.multi_reduction <maximumf>, %336, %cst_103 [1] : vector<8x16xf32> to vector<8xf32>
    %338 = vector.shape_cast %337 : vector<8xf32> to vector<8x1xf32>
    %339 = vector.broadcast %338 : vector<8x1xf32> to vector<8x16xf32>
    %340 = arith.subf %336, %339 : vector<8x16xf32>
    %341 = math.exp %340 : vector<8x16xf32>
    %cst_104 = arith.constant dense<0.000000e+00> : vector<8xf32>
    %342 = vector.multi_reduction <add>, %341, %cst_104 [1] : vector<8x16xf32> to vector<8xf32>
    %343 = vector.shape_cast %342 : vector<8xf32> to vector<8x1xf32>
    %344 = vector.broadcast %343 : vector<8x1xf32> to vector<8x16xf32>
    %345 = arith.divf %341, %344 : vector<8x16xf32>
    %346 = arith.truncf %345 : vector<8x16xf32> to vector<8x16xbf16>
    %347 = vector.extract_strided_slice %314 {offsets = [0, 8], sizes = [16, 8], strides = [1, 1]} : vector<16x32xbf16> to vector<16x8xbf16>
    %cst_105 = arith.constant dense<0.000000e+00> : vector<8x8xf32>
    %348 = tpu.matmul %346, %347, %cst_105 {dimension_numbers = #tpu.dot_dimension_numbers<[1], [0], [0], [1], [0, 0, 1, 1], [], []>} : vector<8x16xbf16>, vector<16x8xbf16>, vector<8x8xf32> -> vector<8x8xf32>
    %349 = vector.extract_strided_slice %310 {offsets = [0, 16], sizes = [8, 8], strides = [1, 1]} : vector<8x32xbf16> to vector<8x8xbf16>
    %350 = vector.extract_strided_slice %312 {offsets = [0, 16], sizes = [16, 8], strides = [1, 1]} : vector<16x32xbf16> to vector<16x8xbf16>
    %cst_106 = arith.constant dense<0.000000e+00> : vector<8x16xf32>
    %351 = tpu.matmul %349, %350, %cst_106 {dimension_numbers = #tpu.dot_dimension_numbers<[1], [1], [0], [0], [0, 0, 1, 0], [], []>} : vector<8x8xbf16>, vector<16x8xbf16>, vector<8x16xf32> -> vector<8x16xf32>
    %cst_107 = arith.constant 0.353553385 : f32
    %352 = vector.broadcast %cst_107 : f32 to vector<8x16xf32>
    %353 = arith.mulf %351, %352 : vector<8x16xf32>
    %cst_108 = arith.constant dense<0xFF800000> : vector<8xf32>
    %354 = vector.multi_reduction <maximumf>, %353, %cst_108 [1] : vector<8x16xf32> to vector<8xf32>
    %355 = vector.shape_cast %354 : vector<8xf32> to vector<8x1xf32>
    %356 = vector.broadcast %355 : vector<8x1xf32> to vector<8x16xf32>
    %357 = arith.subf %353, %356 : vector<8x16xf32>
    %358 = math.exp %357 : vector<8x16xf32>
    %cst_109 = arith.constant dense<0.000000e+00> : vector<8xf32>
    %359 = vector.multi_reduction <add>, %358, %cst_109 [1] : vector<8x16xf32> to vector<8xf32>
    %360 = vector.shape_cast %359 : vector<8xf32> to vector<8x1xf32>
    %361 = vector.broadcast %360 : vector<8x1xf32> to vector<8x16xf32>
    %362 = arith.divf %358, %361 : vector<8x16xf32>
    %363 = arith.truncf %362 : vector<8x16xf32> to vector<8x16xbf16>
    %364 = vector.extract_strided_slice %314 {offsets = [0, 16], sizes = [16, 8], strides = [1, 1]} : vector<16x32xbf16> to vector<16x8xbf16>
    %cst_110 = arith.constant dense<0.000000e+00> : vector<8x8xf32>
    %365 = tpu.matmul %363, %364, %cst_110 {dimension_numbers = #tpu.dot_dimension_numbers<[1], [0], [0], [1], [0, 0, 1, 1], [], []>} : vector<8x16xbf16>, vector<16x8xbf16>, vector<8x8xf32> -> vector<8x8xf32>
    %366 = vector.extract_strided_slice %310 {offsets = [0, 24], sizes = [8, 8], strides = [1, 1]} : vector<8x32xbf16> to vector<8x8xbf16>
    %367 = vector.extract_strided_slice %312 {offsets = [0, 24], sizes = [16, 8], strides = [1, 1]} : vector<16x32xbf16> to vector<16x8xbf16>
    %cst_111 = arith.constant dense<0.000000e+00> : vector<8x16xf32>
    %368 = tpu.matmul %366, %367, %cst_111 {dimension_numbers = #tpu.dot_dimension_numbers<[1], [1], [0], [0], [0, 0, 1, 0], [], []>} : vector<8x8xbf16>, vector<16x8xbf16>, vector<8x16xf32> -> vector<8x16xf32>
    %cst_112 = arith.constant 0.353553385 : f32
    %369 = vector.broadcast %cst_112 : f32 to vector<8x16xf32>
    %370 = arith.mulf %368, %369 : vector<8x16xf32>
    %cst_113 = arith.constant dense<0xFF800000> : vector<8xf32>
    %371 = vector.multi_reduction <maximumf>, %370, %cst_113 [1] : vector<8x16xf32> to vector<8xf32>
    %372 = vector.shape_cast %371 : vector<8xf32> to vector<8x1xf32>
    %373 = vector.broadcast %372 : vector<8x1xf32> to vector<8x16xf32>
    %374 = arith.subf %370, %373 : vector<8x16xf32>
    %375 = math.exp %374 : vector<8x16xf32>
    %cst_114 = arith.constant dense<0.000000e+00> : vector<8xf32>
    %376 = vector.multi_reduction <add>, %375, %cst_114 [1] : vector<8x16xf32> to vector<8xf32>
    %377 = vector.shape_cast %376 : vector<8xf32> to vector<8x1xf32>
    %378 = vector.broadcast %377 : vector<8x1xf32> to vector<8x16xf32>
    %379 = arith.divf %375, %378 : vector<8x16xf32>
    %380 = arith.truncf %379 : vector<8x16xf32> to vector<8x16xbf16>
    %381 = vector.extract_strided_slice %314 {offsets = [0, 24], sizes = [16, 8], strides = [1, 1]} : vector<16x32xbf16> to vector<16x8xbf16>
    %cst_115 = arith.constant dense<0.000000e+00> : vector<8x8xf32>
    %382 = tpu.matmul %380, %381, %cst_115 {dimension_numbers = #tpu.dot_dimension_numbers<[1], [0], [0], [1], [0, 0, 1, 1], [], []>} : vector<8x16xbf16>, vector<16x8xbf16>, vector<8x8xf32> -> vector<8x8xf32>
    %383 = tpu.concatenate %331, %348, %365, %382 in 1 : vector<8x8xf32>, vector<8x8xf32>, vector<8x8xf32>, vector<8x8xf32> -> vector<8x32xf32>
    %384 = arith.truncf %383 : vector<8x32xf32> to vector<8x32xbf16>
    %cst_116 = arith.constant dense<0.000000e+00> : vector<8x32xf32>
    %385 = tpu.matmul %384, %230, %cst_116 {dimension_numbers = #tpu.dot_dimension_numbers<[1], [0], [0], [1], [0, 0, 1, 1], [], []>} : vector<8x32xbf16>, vector<32x32xbf16>, vector<8x32xf32> -> vector<8x32xf32>
    %386 = tpu.concatenate %308, %385 in 0 : vector<8x32xf32>, vector<8x32xf32> -> vector<16x32xf32>
    %387 = vector.broadcast %231 : vector<1x32xf32> to vector<16x32xf32>
    %388 = arith.addf %386, %387 : vector<16x32xf32>
    %389 = arith.addf %215, %388 : vector<16x32xf32>
    %cst_117 = arith.constant dense<0.000000e+00> : vector<16xf32>
    %390 = vector.multi_reduction <add>, %389, %cst_117 [1] : vector<16x32xf32> to vector<16xf32>
    %391 = vector.shape_cast %390 : vector<16xf32> to vector<16x1xf32>
    %cst_118 = arith.constant 3.200000e+01 : f32
    %392 = vector.broadcast %cst_118 : f32 to vector<16x1xf32>
    %393 = arith.divf %391, %392 : vector<16x1xf32>
    %394 = vector.broadcast %393 : vector<16x1xf32> to vector<16x32xf32>
    %395 = arith.subf %389, %394 : vector<16x32xf32>
    %396 = arith.mulf %395, %395 : vector<16x32xf32>
    %cst_119 = arith.constant dense<0.000000e+00> : vector<16xf32>
    %397 = vector.multi_reduction <add>, %396, %cst_119 [1] : vector<16x32xf32> to vector<16xf32>
    %398 = vector.shape_cast %397 : vector<16xf32> to vector<16x1xf32>
    %cst_120 = arith.constant 3.200000e+01 : f32
    %399 = vector.broadcast %cst_120 : f32 to vector<16x1xf32>
    %400 = arith.divf %398, %399 : vector<16x1xf32>
    %401 = vector.broadcast %393 : vector<16x1xf32> to vector<16x32xf32>
    %402 = arith.subf %389, %401 : vector<16x32xf32>
    %cst_121 = arith.constant 9.99999974E-6 : f32
    %403 = vector.broadcast %cst_121 : f32 to vector<16x1xf32>
    %404 = arith.addf %400, %403 : vector<16x1xf32>
    %405 = math.rsqrt %404 : vector<16x1xf32>
    %406 = vector.broadcast %405 : vector<16x1xf32> to vector<16x32xf32>
    %407 = arith.mulf %402, %406 : vector<16x32xf32>
    %c25 = arith.constant 25 : index
    %c0_122 = arith.constant 0 : index
    %408 = vector.load %arg5[%c25, %c0_122] : memref<32x128xf32, #tpu.memory_space<vmem>>, vector<1x32xf32>
    %409 = vector.broadcast %408 : vector<1x32xf32> to vector<16x32xf32>
    %410 = arith.mulf %407, %409 : vector<16x32xf32>
    %c26 = arith.constant 26 : index
    %c0_123 = arith.constant 0 : index
    %411 = vector.load %arg5[%c26, %c0_123] : memref<32x128xf32, #tpu.memory_space<vmem>>, vector<1x32xf32>
    %412 = vector.broadcast %411 : vector<1x32xf32> to vector<16x32xf32>
    %413 = arith.addf %410, %412 : vector<16x32xf32>
    %c0_124 = arith.constant 0 : index
    %c640 = arith.constant 640 : index
    %414 = vector.load %arg3[%c0_124, %c640] : memref<32x768xbf16, #tpu.memory_space<vmem>>, vector<32x128xbf16>
    %415 = arith.truncf %413 : vector<16x32xf32> to vector<16x32xbf16>
    %cst_125 = arith.constant dense<0.000000e+00> : vector<16x128xf32>
    %416 = tpu.matmul %415, %414, %cst_125 {dimension_numbers = #tpu.dot_dimension_numbers<[1], [0], [0], [1], [0, 0, 1, 1], [], []>} : vector<16x32xbf16>, vector<32x128xbf16>, vector<16x128xf32> -> vector<16x128xf32>
    %c21 = arith.constant 21 : index
    %c0_126 = arith.constant 0 : index
    %417 = vector.load %arg5[%c21, %c0_126] : memref<32x128xf32, #tpu.memory_space<vmem>>, vector<1x128xf32>
    %418 = vector.broadcast %417 : vector<1x128xf32> to vector<16x128xf32>
    %419 = arith.addf %416, %418 : vector<16x128xf32>
    %cst_127 = arith.constant 5.000000e-01 : f32
    %420 = vector.broadcast %cst_127 : f32 to vector<16x128xf32>
    %421 = arith.mulf %420, %419 : vector<16x128xf32>
    %cst_128 = arith.constant 0.707106769 : f32
    %422 = vector.broadcast %cst_128 : f32 to vector<16x128xf32>
    %423 = arith.mulf %419, %422 : vector<16x128xf32>
    %424 = math.erf %423 : vector<16x128xf32>
    %cst_129 = arith.constant 1.000000e+00 : f32
    %425 = vector.broadcast %cst_129 : f32 to vector<16x128xf32>
    %426 = arith.addf %425, %424 : vector<16x128xf32>
    %427 = arith.mulf %421, %426 : vector<16x128xf32>
    %c0_130 = arith.constant 0 : index
    %c0_131 = arith.constant 0 : index
    %428 = vector.load %arg4[%c0_130, %c0_131] : memref<128x32xbf16, #tpu.memory_space<vmem>>, vector<128x32xbf16>
    %429 = arith.truncf %427 : vector<16x128xf32> to vector<16x128xbf16>
    %cst_132 = arith.constant dense<0.000000e+00> : vector<16x32xf32>
    %430 = tpu.matmul %429, %428, %cst_132 {dimension_numbers = #tpu.dot_dimension_numbers<[1], [0], [0], [1], [0, 0, 1, 1], [], []>} : vector<16x128xbf16>, vector<128x32xbf16>, vector<16x32xf32> -> vector<16x32xf32>
    %c22 = arith.constant 22 : index
    %c0_133 = arith.constant 0 : index
    %431 = vector.load %arg5[%c22, %c0_133] : memref<32x128xf32, #tpu.memory_space<vmem>>, vector<1x32xf32>
    %432 = vector.broadcast %431 : vector<1x32xf32> to vector<16x32xf32>
    %433 = arith.addf %430, %432 : vector<16x32xf32>
    %434 = arith.addf %413, %433 : vector<16x32xf32>
    %cst_134 = arith.constant dense<0.000000e+00> : vector<16xf32>
    %435 = vector.multi_reduction <add>, %434, %cst_134 [1] : vector<16x32xf32> to vector<16xf32>
    %436 = vector.shape_cast %435 : vector<16xf32> to vector<16x1xf32>
    %cst_135 = arith.constant 3.200000e+01 : f32
    %437 = vector.broadcast %cst_135 : f32 to vector<16x1xf32>
    %438 = arith.divf %436, %437 : vector<16x1xf32>
    %439 = vector.broadcast %438 : vector<16x1xf32> to vector<16x32xf32>
    %440 = arith.subf %434, %439 : vector<16x32xf32>
    %441 = arith.mulf %440, %440 : vector<16x32xf32>
    %cst_136 = arith.constant dense<0.000000e+00> : vector<16xf32>
    %442 = vector.multi_reduction <add>, %441, %cst_136 [1] : vector<16x32xf32> to vector<16xf32>
    %443 = vector.shape_cast %442 : vector<16xf32> to vector<16x1xf32>
    %cst_137 = arith.constant 3.200000e+01 : f32
    %444 = vector.broadcast %cst_137 : f32 to vector<16x1xf32>
    %445 = arith.divf %443, %444 : vector<16x1xf32>
    %446 = vector.broadcast %438 : vector<16x1xf32> to vector<16x32xf32>
    %447 = arith.subf %434, %446 : vector<16x32xf32>
    %cst_138 = arith.constant 9.99999974E-6 : f32
    %448 = vector.broadcast %cst_138 : f32 to vector<16x1xf32>
    %449 = arith.addf %445, %448 : vector<16x1xf32>
    %450 = math.rsqrt %449 : vector<16x1xf32>
    %451 = vector.broadcast %450 : vector<16x1xf32> to vector<16x32xf32>
    %452 = arith.mulf %447, %451 : vector<16x32xf32>
    %c27 = arith.constant 27 : index
    %c0_139 = arith.constant 0 : index
    %453 = vector.load %arg5[%c27, %c0_139] : memref<32x128xf32, #tpu.memory_space<vmem>>, vector<1x32xf32>
    %454 = vector.broadcast %453 : vector<1x32xf32> to vector<16x32xf32>
    %455 = arith.mulf %452, %454 : vector<16x32xf32>
    %c28 = arith.constant 28 : index
    %c0_140 = arith.constant 0 : index
    %456 = vector.load %arg5[%c28, %c0_140] : memref<32x128xf32, #tpu.memory_space<vmem>>, vector<1x32xf32>
    %457 = vector.broadcast %456 : vector<1x32xf32> to vector<16x32xf32>
    %458 = arith.addf %455, %457 : vector<16x32xf32>
    %cst_141 = arith.constant 0.000000e+00 : f32
    %459 = vector.broadcast %cst_141 : f32 to vector<16x96xf32>
    %460 = tpu.concatenate %458, %459 in 1 : vector<16x32xf32>, vector<16x96xf32> -> vector<16x128xf32>
    %c0_142 = arith.constant 0 : index
    %c0_143 = arith.constant 0 : index
    %461 = vector.load %arg6[%c0_142, %c0_143] : memref<16x128xf32, #tpu.memory_space<vmem>>, vector<16x128xf32>
    tpu.vector_store %arg6[%c0_142, %c0_143], %460 {strides = array<i32>} : memref<16x128xf32, #tpu.memory_space<vmem>>, vector<16x128xf32>,
    return
  }
  func.func @transform_0(%arg0: i32) -> (i32, i32) {
    %c0_i32 = arith.constant 0 : i32
    %c0_i32_0 = arith.constant 0 : i32
    %c0_i32_1 = arith.constant 0 : i32
    return %c0_i32, %c0_i32_0 : i32, i32
  }
  func.func @transform_1(%arg0: i32) -> (i32, i32) {
    %c0_i32 = arith.constant 0 : i32
    %c0_i32_0 = arith.constant 0 : i32
    %c0_i32_1 = arith.constant 0 : i32
    return %c0_i32, %c0_i32_0 : i32, i32
  }
  func.func @transform_2(%arg0: i32) -> (i32, i32) {
    %c0_i32 = arith.constant 0 : i32
    %c0_i32_0 = arith.constant 0 : i32
    %c0_i32_1 = arith.constant 0 : i32
    return %c0_i32, %c0_i32_0 : i32, i32
  }
  func.func @transform_3(%arg0: i32) -> (i32, i32) {
    %c0_i32 = arith.constant 0 : i32
    %c0_i32_0 = arith.constant 0 : i32
    %c0_i32_1 = arith.constant 0 : i32
    return %c0_i32, %c0_i32_0 : i32, i32
  }
  func.func @transform_4(%arg0: i32) -> (i32, i32) {
    %c0_i32 = arith.constant 0 : i32
    %c0_i32_0 = arith.constant 0 : i32
    %c0_i32_1 = arith.constant 0 : i32
    return %c0_i32, %c0_i32_0 : i32, i32
  }
  func.func @transform_5(%arg0: i32) -> (i32, i32) {
    %c0_i32 = arith.constant 0 : i32
    %c0_i32_0 = arith.constant 0 : i32
    %c0_i32_1 = arith.constant 0 : i32
    return %c0_i32, %c0_i32_0 : i32, i32
  }
}

</mosaic_0001>

<llo_original>
// kernel: tpu_custom_call.1
$region0: #{tpu_custom_call.1}
  #allocation0 [shape = 'u32[]', space=smem, size = 0x4, offset = 0x4, fixed_abs, tag = 'smem constant byte address 0x4 - core index']
  #allocation1 [shape = 'u32[72,128]{1,0:T(1,128)}', space=vmem, size = 0x9000, scoped, tag = 'internal scratch']
  %s0 = inlined_call_operand.vmem [shape: f32[16,32], index: 0, kind: input, shape index: {}]
  %s1 = inlined_call_operand.vmem [shape: f32[32,32], index: 1, kind: input, shape index: {}]
  %s2 = inlined_call_operand.hbm [shape: bf16[32,768], index: 2, kind: input, shape index: {}]
  %s3 = inlined_call_operand.vmem [shape: bf16[128,32], index: 3, kind: input, shape index: {}]
  %s4 = inlined_call_operand.vmem [shape: f32[32,128], index: 4, kind: input, shape index: {}]
  %s5 = inlined_call_operand.hbm [shape: f32[16,128], index: 5, kind: output, shape index: {}]
  %s6 = sld [smem:[#allocation0]]
  $region34: #{tpu_custom_call.1} parent=0
    _
  %s8 = ssub.s32 1, %s6
  %s9 = scalar_select 0, %s8, %s6
  $region1: #{tpu_custom_call.1} parent=0
    #allocation2 [shape = 'u8[49152]{0}', space=vmem, size = 0xc000, scoped, tag = 'input window, operand 2, single buffered']
    #allocation3 [shape = 's32[1]{0}', space=sflag, size = 0x4, scoped, tag = 'scoped memory for tpu_custom_call.1']
    #allocation4 [shape = 's32[1]{0}', space=sflag, size = 0x4, scoped, tag = 'scoped memory for tpu_custom_call.1']
    #allocation5 [shape = 'u8[8192]{0}', space=vmem, size = 0x2000, scoped, tag = 'output window, operand 0, single buffered']
    %10 = vsyncpa [#allocation3], 0
    %11 = vsyncpa [#allocation4], 0
    // Predicated region
    $region2: #{tpu_custom_call.1} parent=1 // pred_check
      _
    $region3: #{tpu_custom_call.1} parent=1 // pred_check_branch
      %13 = sbr.rel (0) target = $region5
    $region4: #{tpu_custom_call.1} parent=1 // pred_region
      _
    $region5: #{tpu_custom_call.1} parent=1 // pred_fallthru
      _
    // Predicated region
    $region6: #{tpu_custom_call.1} parent=1 // pred_check
      _
    $region7: #{tpu_custom_call.1} parent=1 // pred_check_branch
      %15 = sbr.rel (0) target = $region9
    $region8: #{tpu_custom_call.1} parent=1 // pred_region
      _
    $region9: #{tpu_custom_call.1} parent=1 // pred_fallthru
      _
    // Predicated region
    $region10: #{tpu_custom_call.1} parent=1 // pred_check
      _
    $region11: #{tpu_custom_call.1} parent=1 // pred_check_branch
      %17 = sbr.rel (0) target = $region13
    $region12: #{tpu_custom_call.1} parent=1 // pred_region
      %19 = vsyncadd [#allocation3], 0
      %s20 = sshll.u32 %s2, 4
      %s21 = int_to_ptr.hbm [resolvable:$true] %s20
      %s22 = sshll.u32 [#allocation2], 4
      %s23 = int_to_ptr.vmem [resolvable:$true] %s22
      %28 = dma.hbm_to_vmem [thread:$0]  %s21, 1536, %s23, [#allocation3], 384, 384, 24
    $region13: #{tpu_custom_call.1} parent=1 // pred_fallthru
      _
    // Predicated region
    $region14: #{tpu_custom_call.1} parent=1 // pred_check
      _
    $region15: #{tpu_custom_call.1} parent=1 // pred_check_branch
      %30 = sbr.rel (0) target = $region17
    $region16: #{tpu_custom_call.1} parent=1 // pred_region
      _
    $region17: #{tpu_custom_call.1} parent=1 // pred_fallthru
      _
    // Predicated region
    $region18: #{tpu_custom_call.1} parent=1 // pred_check
      _
    $region19: #{tpu_custom_call.1} parent=1 // pred_check_branch
      %32 = sbr.rel (0) target = $region21
    $region20: #{tpu_custom_call.1} parent=1 // pred_region
      _
    $region21: #{tpu_custom_call.1} parent=1 // pred_fallthru
      _
    // Predicated region
    $region22: #{tpu_custom_call.1} parent=1 // pred_check
      _
    $region23: #{tpu_custom_call.1} parent=1 // pred_check_branch
      %34 = sbr.rel (0) target = $region25
    $region24: #{tpu_custom_call.1} parent=1 // pred_region
      %36 = dma.done [#allocation3], 1536
    $region25: #{tpu_custom_call.1} parent=1 // pred_fallthru
      _
    %v38 = vlaneseq
    %v39 = vshrl.u32 %v38, 7
    %v40 = vlaneseq
    %v41 = vand.u32 %v40, 127
    %vm42 = vcmp.le.s32.totalorder %v41, %v39
    %v43 = vld [vmem:[%s0] sm:$0xff]
    %v44 = vld [vmem:[%s0 + $0x8] sm:$0xff]
    %v45 = vld [vmem:[%s1] sm:$0xff]
    %v46 = vld [vmem:[%s1 + $0x8] sm:$0xff]
    %v47 = vld [vmem:[%s1 + $0x10] sm:$0xff]
    %v48 = vld [vmem:[%s1 + $0x18] sm:$0xff]
    %v49 = vld [vmem:[%s4] sm:$0xff]
    %v50 = vld [vmem:[%s4 + $0x8] sm:$0xff]
    %v51 = vadd.f32 %v43, %v49
    %v52 = vadd.f32 %v44, %v50
    %v53 = vld [vmem:[#allocation2] sm:$0xf]
    %v54 = vld [vmem:[#allocation2 + $0x18] sm:$0xf]
    %v55 = vld [vmem:[#allocation2 + $0x30] sm:$0xf]
    %v56 = vld [vmem:[#allocation2 + $0x48] sm:$0xf]
    %v57 = vpack.c.bf16 %v52, %v51
    %v58 = vld [vmem:[%s4 + $0x10] sm:$0x1]
    %v59 = vperm.slane %v58, 0
    %v64 = vunpack.c.l.b16 %v53
    %v65 = vunpack.c.l.b16 %v54
    %v66 = vunpack.c.l.b16 %v55
    %v67 = vunpack.c.l.b16 %v56
    %v68 = vpack.c.b16 %v65, %v64
    %v69 = vpack.c.b16 %v67, %v66
    %vm72 = vcmask 261120
    %v74 = vsel %vm72, %v57, 0
    %76 = vmatpush.bf16.msra.mxu0 0
    %77 = vmatpush.bf16.msra.mxu0 0
    %78 = vmatpush.bf16.msra.mxu0 0
    %79 = vmatpush.bf16.msra.mxu0 0
    %80 = vmatpush.bf16.msra.mxu0 0
    %81 = vmatpush.bf16.msra.mxu0 0
    %82 = vmatpush.bf16.msra.mxu0 %v69
    %83 = vmatpush.bf16.msra.mxu0 %v68
    %84 = vmatmul.bf16.gmra.mxu0 %v74
    %v85 = vpop.f32.mrf.mxu0
    %v86 = vadd.f32 %v59, %v85
    %v87 = vpop.f32.mrf.mxu0
    %v88 = vadd.f32 %v59, %v87
    %89 = vdwg.mxu0
    %v90 = vld [vmem:[#allocation2 + $0x4] sm:$0xf]
    %v91 = vld [vmem:[#allocation2 + $0x1c] sm:$0xf]
    %v92 = vld [vmem:[#allocation2 + $0x34] sm:$0xf]
    %v93 = vld [vmem:[#allocation2 + $0x4c] sm:$0xf]
    %v94 = vld [vmem:[%s4 + $0x11] sm:$0x1]
    %v95 = vpack.c.bf16 %v86, %v86
    %v97 = vunpack.c.l.b16 %v95
    %v98 = vpack.c.b16 %v97, %v97
    %99 = vrot.lane.b32.xlu0 %v98, 96
    %v100 = vpop.permute.xlu0 %99
    %vm101 = vcmask 64512
    %v103 = vsel %vm101, %v95, 0
    %v106 = vsel %vm101, %v100, 0
    %108 = vmatpush.bf16.xpose.msra.mxu0 0
    %109 = vmatpush.bf16.xpose.msra.mxu0 0
    %110 = vmatpush.bf16.xpose.msra.mxu0 0
    %111 = vmatpush.bf16.xpose.msra.mxu0 0
    %112 = vmatpush.bf16.xpose.msra.mxu0 0
    %113 = vmatpush.bf16.xpose.msra.mxu0 0
    %114 = vmatpush.bf16.xpose.msra.mxu0 0
    %115 = vmatpush.bf16.xpose.msra.mxu0 %v106
    %116 = vmatmul.bf16.gmra.mxu0 %v103
    %v117 = vpop.f32.mrf.mxu0
    %v118 = vadd.f32 0.0, %v117
    %v119 = vpop.f32.mrf.mxu0
    %120 = vdwg.mxu0
    %v121 = vmul.f32 %v118, 0.35355338
    %v122 = vsel %vm42, %v121, -1e+30
    %v123 = vsel %vm101, %v122, -inf
    %124 = vmax.xlane.f32.xlu0 %v123
    %v125 = vpop.xlane.xlu0 %124
    %v126 = vsub.f32 %v122, %v125
    %v127 = vmul.f32 %v126, 1.442695
    %v128 = vpow.pop %v127
    %v129 = vsel %vm101, %v128, 0.0
    %130 = vadd.xlane.f32.xlu0 %v129
    %v131 = vpop.xlane.xlu0 %130
    %v132 = vrcp.pop %v131
    %v133 = vmul.f32 %v131, %v132
    %v134 = vsub.f32 1.0, %v133
    %v135 = vmul.f32 %v132, %v134
    %v136 = vadd.f32 %v132, %v135
    %vm137 = vweird.f32 %v131
    %vm138 = vweird.f32 %v132
    %vm139 = vmor %vm137, %vm138
    %v140 = vsel %vm139, %v132, %v136
    %v141 = vand.u32 2147483647, %v131
    %vm142 = vcmp.eq.f32.partialorder %v141, 8.507059e+37
    %v143 = vand.u32 %v131, 2147483648
    %v144 = vor.u32 1.1754944e-38, %v143
    %v145 = vsel %vm142, %v144, %v140
    %v146 = vmul.f32 %v128, %v145
    %v147 = vpack.c.bf16 %v146, %v146
    %148 = vrot.lane.b32.xlu0 %v98, 64
    %v149 = vpop.permute.xlu0 %148
    %v151 = vsel %vm101, %v147, 0
    %vm153 = vcmask 1043456
    %v155 = vsel %vm153, %v149, 0
    %157 = vmatpush.bf16.msra.mxu0 0
    %158 = vmatpush.bf16.msra.mxu0 0
    %159 = vmatpush.bf16.msra.mxu0 0
    %160 = vmatpush.bf16.msra.mxu0 0
    %161 = vmatpush.bf16.msra.mxu0 0
    %162 = vmatpush.bf16.msra.mxu0 0
    %163 = vmatpush.bf16.msra.mxu0 0
    %164 = vmatpush.bf16.msra.mxu0 %v155
    %165 = vmatmul.bf16.gmra.mxu0 %v151
    %v166 = vpop.f32.mrf.mxu0
    %v167 = vadd.f32 0.0, %v166
    %v168 = vpop.f32.mrf.mxu0
    %169 = vdwg.mxu0
    %170 = vrot.lane.b32.xlu0 %v98, 120
    %v171 = vpop.permute.xlu0 %170
    %172 = vrot.lane.b32.xlu0 %v98, 88
    %v173 = vpop.permute.xlu0 %172
    %v175 = vsel %vm101, %v171, 0
    %v178 = vsel %vm101, %v173, 0
    %180 = vmatpush.bf16.xpose.msra.mxu0 0
    %181 = vmatpush.bf16.xpose.msra.mxu0 0
    %182 = vmatpush.bf16.xpose.msra.mxu0 0
    %183 = vmatpush.bf16.xpose.msra.mxu0 0
    %184 = vmatpush.bf16.xpose.msra.mxu0 0
    %185 = vmatpush.bf16.xpose.msra.mxu0 0
    %186 = vmatpush.bf16.xpose.msra.mxu0 0
    %187 = vmatpush.bf16.xpose.msra.mxu0 %v178
    %188 = vmatmul.bf16.gmra.mxu0 %v175
    %v189 = vpop.f32.mrf.mxu0
    %v190 = vadd.f32 0.0, %v189
    %v191 = vpop.f32.mrf.mxu0
    %192 = vdwg.mxu0
    %v193 = vmul.f32 %v190, 0.35355338
    %v194 = vsel %vm42, %v193, -1e+30
    %v195 = vsel %vm101, %v194, -inf
    %196 = vmax.xlane.f32.xlu0 %v195
    %v197 = vpop.xlane.xlu0 %196
    %v198 = vsub.f32 %v194, %v197
    %v199 = vmul.f32 %v198, 1.442695
    %v200 = vpow.pop %v199
    %v201 = vsel %vm101, %v200, 0.0
    %202 = vadd.xlane.f32.xlu0 %v201
    %v203 = vpop.xlane.xlu0 %202
    %v204 = vrcp.pop %v203
    %v205 = vmul.f32 %v203, %v204
    %v206 = vsub.f32 1.0, %v205
    %v207 = vmul.f32 %v204, %v206
    %v208 = vadd.f32 %v204, %v207
    %vm209 = vweird.f32 %v203
    %vm210 = vweird.f32 %v204
    %vm211 = vmor %vm209, %vm210
    %v212 = vsel %vm211, %v204, %v208
    %v213 = vand.u32 2147483647, %v203
    %vm214 = vcmp.eq.f32.partialorder %v213, 8.507059e+37
    %v215 = vand.u32 %v203, 2147483648
    %v216 = vor.u32 1.1754944e-38, %v215
    %v217 = vsel %vm214, %v216, %v212
    %v218 = vmul.f32 %v200, %v217
    %v219 = vpack.c.bf16 %v218, %v218
    %220 = vrot.lane.b32.xlu0 %v98, 56
    %v221 = vpop.permute.xlu0 %220
    %v223 = vsel %vm101, %v219, 0
    %v226 = vsel %vm153, %v221, 0
    %228 = vmatpush.bf16.msra.mxu0 0
    %229 = vmatpush.bf16.msra.mxu0 0
    %230 = vmatpush.bf16.msra.mxu0 0
    %231 = vmatpush.bf16.msra.mxu0 0
    %232 = vmatpush.bf16.msra.mxu0 0
    %233 = vmatpush.bf16.msra.mxu0 0
    %234 = vmatpush.bf16.msra.mxu0 0
    %235 = vmatpush.bf16.msra.mxu0 %v226
    %236 = vmatmul.bf16.gmra.mxu0 %v223
    %v237 = vpop.f32.mrf.mxu0
    %v238 = vadd.f32 0.0, %v237
    %v239 = vpop.f32.mrf.mxu0
    %240 = vdwg.mxu0
    %241 = vrot.lane.b32.xlu0 %v98, 112
    %v242 = vpop.permute.xlu0 %241
    %243 = vrot.lane.b32.xlu0 %v98, 80
    %v244 = vpop.permute.xlu0 %243
    %v246 = vsel %vm101, %v242, 0
    %v249 = vsel %vm101, %v244, 0
    %251 = vmatpush.bf16.xpose.msra.mxu0 0
    %252 = vmatpush.bf16.xpose.msra.mxu0 0
    %253 = vmatpush.bf16.xpose.msra.mxu0 0
    %254 = vmatpush.bf16.xpose.msra.mxu0 0
    %255 = vmatpush.bf16.xpose.msra.mxu0 0
    %256 = vmatpush.bf16.xpose.msra.mxu0 0
    %257 = vmatpush.bf16.xpose.msra.mxu0 0
    %258 = vmatpush.bf16.xpose.msra.mxu0 %v249
    %259 = vmatmul.bf16.gmra.mxu0 %v246
    %v260 = vpop.f32.mrf.mxu0
    %v261 = vadd.f32 0.0, %v260
    %v262 = vpop.f32.mrf.mxu0
    %263 = vdwg.mxu0
    %v264 = vmul.f32 %v261, 0.35355338
    %v265 = vsel %vm42, %v264, -1e+30
    %v266 = vsel %vm101, %v265, -inf
    %267 = vmax.xlane.f32.xlu0 %v266
    %v268 = vpop.xlane.xlu0 %267
    %v269 = vsub.f32 %v265, %v268
    %v270 = vmul.f32 %v269, 1.442695
    %v271 = vpow.pop %v270
    %v272 = vsel %vm101, %v271, 0.0
    %273 = vadd.xlane.f32.xlu0 %v272
    %v274 = vpop.xlane.xlu0 %273
    %v275 = vrcp.pop %v274
    %v276 = vmul.f32 %v274, %v275
    %v277 = vsub.f32 1.0, %v276
    %v278 = vmul.f32 %v275, %v277
    %v279 = vadd.f32 %v275, %v278
    %vm280 = vweird.f32 %v274
    %vm281 = vweird.f32 %v275
    %vm282 = vmor %vm280, %vm281
    %v283 = vsel %vm282, %v275, %v279
    %v284 = vand.u32 2147483647, %v274
    %vm285 = vcmp.eq.f32.partialorder %v284, 8.507059e+37
    %v286 = vand.u32 %v274, 2147483648
    %v287 = vor.u32 1.1754944e-38, %v286
    %v288 = vsel %vm285, %v287, %v283
    %v289 = vmul.f32 %v271, %v288
    %v290 = vpack.c.bf16 %v289, %v289
    %291 = vrot.lane.b32.xlu0 %v98, 48
    %v292 = vpop.permute.xlu0 %291
    %v294 = vsel %vm101, %v290, 0
    %v297 = vsel %vm153, %v292, 0
    %299 = vmatpush.bf16.msra.mxu0 0
    %300 = vmatpush.bf16.msra.mxu0 0
    %301 = vmatpush.bf16.msra.mxu0 0
    %302 = vmatpush.bf16.msra.mxu0 0
    %303 = vmatpush.bf16.msra.mxu0 0
    %304 = vmatpush.bf16.msra.mxu0 0
    %305 = vmatpush.bf16.msra.mxu0 0
    %306 = vmatpush.bf16.msra.mxu0 %v297
    %307 = vmatmul.bf16.gmra.mxu0 %v294
    %v308 = vpop.f32.mrf.mxu0
    %v309 = vadd.f32 0.0, %v308
    %v310 = vpop.f32.mrf.mxu0
    %311 = vdwg.mxu0
    %312 = vrot.lane.b32.xlu0 %v98, 104
    %v313 = vpop.permute.xlu0 %312
    %314 = vrot.lane.b32.xlu0 %v98, 72
    %v315 = vpop.permute.xlu0 %314
    %v317 = vsel %vm101, %v313, 0
    %v320 = vsel %vm101, %v315, 0
    %322 = vmatpush.bf16.xpose.msra.mxu0 0
    %323 = vmatpush.bf16.xpose.msra.mxu0 0
    %324 = vmatpush.bf16.xpose.msra.mxu0 0
    %325 = vmatpush.bf16.xpose.msra.mxu0 0
    %326 = vmatpush.bf16.xpose.msra.mxu0 0
    %327 = vmatpush.bf16.xpose.msra.mxu0 0
    %328 = vmatpush.bf16.xpose.msra.mxu0 0
    %329 = vmatpush.bf16.xpose.msra.mxu0 %v320
    %330 = vmatmul.bf16.gmra.mxu0 %v317
    %v331 = vpop.f32.mrf.mxu0
    %v332 = vadd.f32 0.0, %v331
    %v333 = vpop.f32.mrf.mxu0
    %334 = vdwg.mxu0
    %v335 = vmul.f32 %v332, 0.35355338
    %v336 = vsel %vm42, %v335, -1e+30
    %v337 = vsel %vm101, %v336, -inf
    %338 = vmax.xlane.f32.xlu0 %v337
    %v339 = vpop.xlane.xlu0 %338
    %v340 = vsub.f32 %v336, %v339
    %v341 = vmul.f32 %v340, 1.442695
    %v342 = vpow.pop %v341
    %v343 = vsel %vm101, %v342, 0.0
    %344 = vadd.xlane.f32.xlu0 %v343
    %v345 = vpop.xlane.xlu0 %344
    %v346 = vrcp.pop %v345
    %v347 = vmul.f32 %v345, %v346
    %v348 = vsub.f32 1.0, %v347
    %v349 = vmul.f32 %v346, %v348
    %v350 = vadd.f32 %v346, %v349
    %vm351 = vweird.f32 %v345
    %vm352 = vweird.f32 %v346
    %vm353 = vmor %vm351, %vm352
    %v354 = vsel %vm353, %v346, %v350
    %v355 = vand.u32 2147483647, %v345
    %vm356 = vcmp.eq.f32.partialorder %v355, 8.507059e+37
    %v357 = vand.u32 %v345, 2147483648
    %v358 = vor.u32 1.1754944e-38, %v357
    %v359 = vsel %vm356, %v358, %v354
    %v360 = vmul.f32 %v342, %v359
    %v361 = vpack.c.bf16 %v360, %v360
    %362 = vrot.lane.b32.xlu0 %v98, 40
    %v363 = vpop.permute.xlu0 %362
    %v365 = vsel %vm101, %v361, 0
    %v368 = vsel %vm153, %v363, 0
    %370 = vmatpush.bf16.msra.mxu0 0
    %371 = vmatpush.bf16.msra.mxu0 0
    %372 = vmatpush.bf16.msra.mxu0 0
    %373 = vmatpush.bf16.msra.mxu0 0
    %374 = vmatpush.bf16.msra.mxu0 0
    %375 = vmatpush.bf16.msra.mxu0 0
    %376 = vmatpush.bf16.msra.mxu0 0
    %377 = vmatpush.bf16.msra.mxu0 %v368
    %378 = vmatmul.bf16.gmra.mxu0 %v365
    %v379 = vpop.f32.mrf.mxu0
    %v380 = vadd.f32 0.0, %v379
    %v381 = vpop.f32.mrf.mxu0
    %382 = vdwg.mxu0
    %384 = vrot.lane.b32.xlu0 %v238, 8
    %v385 = vpop.permute.xlu0 %384
    %388 = vrot.lane.b32.xlu0 %v309, 16
    %v389 = vpop.permute.xlu0 %388
    %392 = vrot.lane.b32.xlu0 %v380, 24
    %v393 = vpop.permute.xlu0 %392
    %v395 = vsel %vm101, %v167, %v385
    %vm396 = vcmask 130048
    %v397 = vsel %vm396, %v395, %v389
    %vm398 = vcmask 195584
    %v399 = vsel %vm398, %v397, %v393
    %v400 = vpack.c.bf16 %v399, %v399
    %v405 = vunpack.c.l.b16 %v90
    %v406 = vunpack.c.l.b16 %v91
    %v407 = vunpack.c.l.b16 %v92
    %v408 = vunpack.c.l.b16 %v93
    %v409 = vpack.c.b16 %v406, %v405
    %v410 = vpack.c.b16 %v408, %v407
    %v414 = vsel %vm72, %v400, 0
    %416 = vmatpush.bf16.msra.mxu0 0
    %417 = vmatpush.bf16.msra.mxu0 0
    %418 = vmatpush.bf16.msra.mxu0 0
    %419 = vmatpush.bf16.msra.mxu0 0
    %420 = vmatpush.bf16.msra.mxu0 0
    %421 = vmatpush.bf16.msra.mxu0 0
    %422 = vmatpush.bf16.msra.mxu0 %v410
    %423 = vmatpush.bf16.msra.mxu0 %v409
    %424 = vmatmul.bf16.gmra.mxu0 %v414
    %v425 = vpop.f32.mrf.mxu0
    %v426 = vadd.f32 0.0, %v425
    %v427 = vpop.f32.mrf.mxu0
    %428 = vdwg.mxu0
    %v429 = vpack.c.bf16 %v88, %v88
    %v431 = vunpack.c.l.b16 %v429
    %v432 = vpack.c.b16 %v431, %v431
    %433 = vrot.lane.b32.xlu0 %v432, 96
    %v434 = vpop.permute.xlu0 %433
    %v436 = vsel %vm101, %v429, 0
    %v439 = vsel %vm101, %v434, 0
    %441 = vmatpush.bf16.xpose.msra.mxu0 0
    %442 = vmatpush.bf16.xpose.msra.mxu0 0
    %443 = vmatpush.bf16.xpose.msra.mxu0 0
    %444 = vmatpush.bf16.xpose.msra.mxu0 0
    %445 = vmatpush.bf16.xpose.msra.mxu0 0
    %446 = vmatpush.bf16.xpose.msra.mxu0 0
    %447 = vmatpush.bf16.xpose.msra.mxu0 0
    %448 = vmatpush.bf16.xpose.msra.mxu0 %v439
    %449 = vmatmul.bf16.gmra.mxu0 %v436
    %v450 = vpop.f32.mrf.mxu0
    %v451 = vadd.f32 0.0, %v450
    %v452 = vpop.f32.mrf.mxu0
    %453 = vdwg.mxu0
    %v454 = vmul.f32 %v451, 0.35355338
    %v455 = vsel %vm42, %v454, -1e+30
    %v456 = vsel %vm101, %v455, -inf
    %457 = vmax.xlane.f32.xlu0 %v456
    %v458 = vpop.xlane.xlu0 %457
    %v459 = vsub.f32 %v455, %v458
    %v460 = vmul.f32 %v459, 1.442695
    %v461 = vpow.pop %v460
    %v462 = vsel %vm101, %v461, 0.0
    %463 = vadd.xlane.f32.xlu0 %v462
    %v464 = vpop.xlane.xlu0 %463
    %v465 = vrcp.pop %v464
    %v466 = vmul.f32 %v464, %v465
    %v467 = vsub.f32 1.0, %v466
    %v468 = vmul.f32 %v465, %v467
    %v469 = vadd.f32 %v465, %v468
    %vm470 = vweird.f32 %v464
    %vm471 = vweird.f32 %v465
    %vm472 = vmor %vm470, %vm471
    %v473 = vsel %vm472, %v465, %v469
    %v474 = vand.u32 2147483647, %v464
    %vm475 = vcmp.eq.f32.partialorder %v474, 8.507059e+37
    %v476 = vand.u32 %v464, 2147483648
    %v477 = vor.u32 1.1754944e-38, %v476
    %v478 = vsel %vm475, %v477, %v473
    %v479 = vmul.f32 %v461, %v478
    %v480 = vpack.c.bf16 %v479, %v479
    %481 = vrot.lane.b32.xlu0 %v432, 64
    %v482 = vpop.permute.xlu0 %481
    %v484 = vsel %vm101, %v480, 0
    %v487 = vsel %vm153, %v482, 0
    %489 = vmatpush.bf16.msra.mxu0 0
    %490 = vmatpush.bf16.msra.mxu0 0
    %491 = vmatpush.bf16.msra.mxu0 0
    %492 = vmatpush.bf16.msra.mxu0 0
    %493 = vmatpush.bf16.msra.mxu0 0
    %494 = vmatpush.bf16.msra.mxu0 0
    %495 = vmatpush.bf16.msra.mxu0 0
    %496 = vmatpush.bf16.msra.mxu0 %v487
    %497 = vmatmul.bf16.gmra.mxu0 %v484
    %v498 = vpop.f32.mrf.mxu0
    %v499 = vadd.f32 0.0, %v498
    %v500 = vpop.f32.mrf.mxu0
    %501 = vdwg.mxu0
    %502 = vrot.lane.b32.xlu0 %v432, 120
    %v503 = vpop.permute.xlu0 %502
    %504 = vrot.lane.b32.xlu0 %v432, 88
    %v505 = vpop.permute.xlu0 %504
    %v507 = vsel %vm101, %v503, 0
    %v510 = vsel %vm101, %v505, 0
    %512 = vmatpush.bf16.xpose.msra.mxu0 0
    %513 = vmatpush.bf16.xpose.msra.mxu0 0
    %514 = vmatpush.bf16.xpose.msra.mxu0 0
    %515 = vmatpush.bf16.xpose.msra.mxu0 0
    %516 = vmatpush.bf16.xpose.msra.mxu0 0
    %517 = vmatpush.bf16.xpose.msra.mxu0 0
    %518 = vmatpush.bf16.xpose.msra.mxu0 0
    %519 = vmatpush.bf16.xpose.msra.mxu0 %v510
    %520 = vmatmul.bf16.gmra.mxu0 %v507
    %v521 = vpop.f32.mrf.mxu0
    %v522 = vadd.f32 0.0, %v521
    %v523 = vpop.f32.mrf.mxu0
    %524 = vdwg.mxu0
    %v525 = vmul.f32 %v522, 0.35355338
    %v526 = vsel %vm42, %v525, -1e+30
    %v527 = vsel %vm101, %v526, -inf
    %528 = vmax.xlane.f32.xlu0 %v527
    %v529 = vpop.xlane.xlu0 %528
    %v530 = vsub.f32 %v526, %v529
    %v531 = vmul.f32 %v530, 1.442695
    %v532 = vpow.pop %v531
    %v533 = vsel %vm101, %v532, 0.0
    %534 = vadd.xlane.f32.xlu0 %v533
    %v535 = vpop.xlane.xlu0 %534
    %v536 = vrcp.pop %v535
    %v537 = vmul.f32 %v535, %v536
    %v538 = vsub.f32 1.0, %v537
    %v539 = vmul.f32 %v536, %v538
    %v540 = vadd.f32 %v536, %v539
    %vm541 = vweird.f32 %v535
    %vm542 = vweird.f32 %v536
    %vm543 = vmor %vm541, %vm542
    %v544 = vsel %vm543, %v536, %v540
    %v545 = vand.u32 2147483647, %v535
    %vm546 = vcmp.eq.f32.partialorder %v545, 8.507059e+37
    %v547 = vand.u32 %v535, 2147483648
    %v548 = vor.u32 1.1754944e-38, %v547
    %v549 = vsel %vm546, %v548, %v544
    %v550 = vmul.f32 %v532, %v549
    %v551 = vpack.c.bf16 %v550, %v550
    %552 = vrot.lane.b32.xlu0 %v432, 56
    %v553 = vpop.permute.xlu0 %552
    %v555 = vsel %vm101, %v551, 0
    %v558 = vsel %vm153, %v553, 0
    %560 = vmatpush.bf16.msra.mxu0 0
    %561 = vmatpush.bf16.msra.mxu0 0
    %562 = vmatpush.bf16.msra.mxu0 0
    %563 = vmatpush.bf16.msra.mxu0 0
    %564 = vmatpush.bf16.msra.mxu0 0
    %565 = vmatpush.bf16.msra.mxu0 0
    %566 = vmatpush.bf16.msra.mxu0 0
    %567 = vmatpush.bf16.msra.mxu0 %v558
    %568 = vmatmul.bf16.gmra.mxu0 %v555
    %v569 = vpop.f32.mrf.mxu0
    %v570 = vadd.f32 0.0, %v569
    %v571 = vpop.f32.mrf.mxu0
    %572 = vdwg.mxu0
    %573 = vrot.lane.b32.xlu0 %v432, 112
    %v574 = vpop.permute.xlu0 %573
    %575 = vrot.lane.b32.xlu0 %v432, 80
    %v576 = vpop.permute.xlu0 %575
    %v578 = vsel %vm101, %v574, 0
    %v581 = vsel %vm101, %v576, 0
    %583 = vmatpush.bf16.xpose.msra.mxu0 0
    %584 = vmatpush.bf16.xpose.msra.mxu0 0
    %585 = vmatpush.bf16.xpose.msra.mxu0 0
    %586 = vmatpush.bf16.xpose.msra.mxu0 0
    %587 = vmatpush.bf16.xpose.msra.mxu0 0
    %588 = vmatpush.bf16.xpose.msra.mxu0 0
    %589 = vmatpush.bf16.xpose.msra.mxu0 0
    %590 = vmatpush.bf16.xpose.msra.mxu0 %v581
    %591 = vmatmul.bf16.gmra.mxu0 %v578
    %v592 = vpop.f32.mrf.mxu0
    %v593 = vadd.f32 0.0, %v592
    %v594 = vpop.f32.mrf.mxu0
    %595 = vdwg.mxu0
    %v596 = vmul.f32 %v593, 0.35355338
    %v597 = vsel %vm42, %v596, -1e+30
    %v598 = vsel %vm101, %v597, -inf
    %599 = vmax.xlane.f32.xlu0 %v598
    %v600 = vpop.xlane.xlu0 %599
    %v601 = vsub.f32 %v597, %v600
    %v602 = vmul.f32 %v601, 1.442695
    %v603 = vpow.pop %v602
    %v604 = vsel %vm101, %v603, 0.0
    %605 = vadd.xlane.f32.xlu0 %v604
    %v606 = vpop.xlane.xlu0 %605
    %v607 = vrcp.pop %v606
    %v608 = vmul.f32 %v606, %v607
    %v609 = vsub.f32 1.0, %v608
    %v610 = vmul.f32 %v607, %v609
    %v611 = vadd.f32 %v607, %v610
    %vm612 = vweird.f32 %v606
    %vm613 = vweird.f32 %v607
    %vm614 = vmor %vm612, %vm613
    %v615 = vsel %vm614, %v607, %v611
    %v616 = vand.u32 2147483647, %v606
    %vm617 = vcmp.eq.f32.partialorder %v616, 8.507059e+37
    %v618 = vand.u32 %v606, 2147483648
    %v619 = vor.u32 1.1754944e-38, %v618
    %v620 = vsel %vm617, %v619, %v615
    %v621 = vmul.f32 %v603, %v620
    %v622 = vpack.c.bf16 %v621, %v621
    %623 = vrot.lane.b32.xlu0 %v432, 48
    %v624 = vpop.permute.xlu0 %623
    %v626 = vsel %vm101, %v622, 0
    %v629 = vsel %vm153, %v624, 0
    %631 = vmatpush.bf16.msra.mxu0 0
    %632 = vmatpush.bf16.msra.mxu0 0
    %633 = vmatpush.bf16.msra.mxu0 0
    %634 = vmatpush.bf16.msra.mxu0 0
    %635 = vmatpush.bf16.msra.mxu0 0
    %636 = vmatpush.bf16.msra.mxu0 0
    %637 = vmatpush.bf16.msra.mxu0 0
    %638 = vmatpush.bf16.msra.mxu0 %v629
    %639 = vmatmul.bf16.gmra.mxu0 %v626
    %v640 = vpop.f32.mrf.mxu0
    %v641 = vadd.f32 0.0, %v640
    %v642 = vpop.f32.mrf.mxu0
    %643 = vdwg.mxu0
    %644 = vrot.lane.b32.xlu0 %v432, 104
    %v645 = vpop.permute.xlu0 %644
    %646 = vrot.lane.b32.xlu0 %v432, 72
    %v647 = vpop.permute.xlu0 %646
    %v649 = vsel %vm101, %v645, 0
    %v652 = vsel %vm101, %v647, 0
    %654 = vmatpush.bf16.xpose.msra.mxu0 0
    %655 = vmatpush.bf16.xpose.msra.mxu0 0
    %656 = vmatpush.bf16.xpose.msra.mxu0 0
    %657 = vmatpush.bf16.xpose.msra.mxu0 0
    %658 = vmatpush.bf16.xpose.msra.mxu0 0
    %659 = vmatpush.bf16.xpose.msra.mxu0 0
    %660 = vmatpush.bf16.xpose.msra.mxu0 0
    %661 = vmatpush.bf16.xpose.msra.mxu0 %v652
    %662 = vmatmul.bf16.gmra.mxu0 %v649
    %v663 = vpop.f32.mrf.mxu0
    %v664 = vadd.f32 0.0, %v663
    %v665 = vpop.f32.mrf.mxu0
    %666 = vdwg.mxu0
    %v667 = vmul.f32 %v664, 0.35355338
    %v668 = vsel %vm42, %v667, -1e+30
    %v669 = vsel %vm101, %v668, -inf
    %670 = vmax.xlane.f32.xlu0 %v669
    %v671 = vpop.xlane.xlu0 %670
    %v672 = vsub.f32 %v668, %v671
    %v673 = vmul.f32 %v672, 1.442695
    %v674 = vpow.pop %v673
    %v675 = vsel %vm101, %v674, 0.0
    %676 = vadd.xlane.f32.xlu0 %v675
    %v677 = vpop.xlane.xlu0 %676
    %v678 = vrcp.pop %v677
    %v679 = vmul.f32 %v677, %v678
    %v680 = vsub.f32 1.0, %v679
    %v681 = vmul.f32 %v678, %v680
    %v682 = vadd.f32 %v678, %v681
    %vm683 = vweird.f32 %v677
    %vm684 = vweird.f32 %v678
    %vm685 = vmor %vm683, %vm684
    %v686 = vsel %vm685, %v678, %v682
    %v687 = vand.u32 2147483647, %v677
    %vm688 = vcmp.eq.f32.partialorder %v687, 8.507059e+37
    %v689 = vand.u32 %v677, 2147483648
    %v690 = vor.u32 1.1754944e-38, %v689
    %v691 = vsel %vm688, %v690, %v686
    %v692 = vmul.f32 %v674, %v691
    %v693 = vpack.c.bf16 %v692, %v692
    %694 = vrot.lane.b32.xlu0 %v432, 40
    %v695 = vpop.permute.xlu0 %694
    %v697 = vsel %vm101, %v693, 0
    %v700 = vsel %vm153, %v695, 0
    %702 = vmatpush.bf16.msra.mxu0 0
    %703 = vmatpush.bf16.msra.mxu0 0
    %704 = vmatpush.bf16.msra.mxu0 0
    %705 = vmatpush.bf16.msra.mxu0 0
    %706 = vmatpush.bf16.msra.mxu0 0
    %707 = vmatpush.bf16.msra.mxu0 0
    %708 = vmatpush.bf16.msra.mxu0 0
    %709 = vmatpush.bf16.msra.mxu0 %v700
    %710 = vmatmul.bf16.gmra.mxu0 %v697
    %v711 = vpop.f32.mrf.mxu0
    %v712 = vadd.f32 0.0, %v711
    %v713 = vpop.f32.mrf.mxu0
    %714 = vdwg.mxu0
    %716 = vrot.lane.b32.xlu0 %v570, 8
    %v717 = vpop.permute.xlu0 %716
    %720 = vrot.lane.b32.xlu0 %v641, 16
    %v721 = vpop.permute.xlu0 %720
    %724 = vrot.lane.b32.xlu0 %v712, 24
    %v725 = vpop.permute.xlu0 %724
    %v727 = vsel %vm101, %v499, %v717
    %v728 = vsel %vm396, %v727, %v721
    %v729 = vsel %vm398, %v728, %v725
    %v730 = vpack.c.bf16 %v729, %v729
    %v732 = vsel %vm72, %v730, 0
    %734 = vmatpush.bf16.msra.mxu0 0
    %735 = vmatpush.bf16.msra.mxu0 0
    %736 = vmatpush.bf16.msra.mxu0 0
    %737 = vmatpush.bf16.msra.mxu0 0
    %738 = vmatpush.bf16.msra.mxu0 0
    %739 = vmatpush.bf16.msra.mxu0 0
    %740 = vmatpush.bf16.msra.mxu0 %v410
    %741 = vmatpush.bf16.msra.mxu0 %v409
    %742 = vmatmul.bf16.gmra.mxu0 %v732
    %v743 = vpop.f32.mrf.mxu0
    %v744 = vadd.f32 0.0, %v743
    %v745 = vpop.f32.mrf.mxu0
    %746 = vdwg.mxu0
    %v747 = vperm.slane %v94, 0
    %v748 = vadd.f32 %v426, %v747
    %v749 = vadd.f32 %v744, %v747
    %v750 = vadd.f32 %v51, %v748
    %v751 = vadd.f32 %v52, %v749
    %v752 = vsel %vm72, %v750, 0.0
    %753 = vadd.xlane.f32.xlu0 %v752
    %v754 = vpop.xlane.xlu0 %753
    %v755 = vsel %vm72, %v751, 0.0
    %756 = vadd.xlane.f32.xlu0 %v755
    %v757 = vpop.xlane.xlu0 %756
    %v758 = vrcp.pop 32.0
    %v759 = vmul.f32 32.0, %v758
    %v760 = vsub.f32 1.0, %v759
    %v761 = vmul.f32 %v758, %v760
    %v762 = vadd.f32 %v758, %v761
    %vm763 = vweird.f32 %v758
    %v764 = vsel %vm763, %v758, %v762
    %v765 = vmul.f32 %v754, %v764
    %v766 = vmul.f32 %v757, %v764
    %v767 = vsub.f32 %v750, %v765
    %v768 = vsub.f32 %v751, %v766
    %v769 = vmul.f32 %v767, %v767
    %v770 = vmul.f32 %v768, %v768
    %v771 = vsel %vm72, %v769, 0.0
    %772 = vadd.xlane.f32.xlu0 %v771
    %v773 = vpop.xlane.xlu0 %772
    %v774 = vsel %vm72, %v770, 0.0
    %775 = vadd.xlane.f32.xlu0 %v774
    %v776 = vpop.xlane.xlu0 %775
    %v777 = vmul.f32 %v773, %v764
    %v778 = vmul.f32 %v776, %v764
    %v779 = vadd.f32 %v777, 1e-05
    %v780 = vadd.f32 %v778, 1e-05
    %v781 = vrsqrt.pop %v779
    %v782 = vmul.f32 %v781, %v779
    %v783 = vmul.f32 %v782, %v781
    %v784 = vmul.f32 0.5, %v783
    %v785 = vsub.f32 1.5, %v784
    %v786 = vmul.f32 %v781, %v785
    %vm787 = vweird.f32 %v779
    %vm788 = vweird.f32 %v781
    %vm789 = vmor %vm787, %vm788
    %v790 = vsel %vm789, %v781, %v786
    %v791 = vrsqrt.pop %v780
    %v792 = vmul.f32 %v791, %v780
    %v793 = vmul.f32 %v792, %v791
    %v794 = vmul.f32 0.5, %v793
    %v795 = vsub.f32 1.5, %v794
    %v796 = vmul.f32 %v791, %v795
    %vm797 = vweird.f32 %v780
    %vm798 = vweird.f32 %v791
    %vm799 = vmor %vm797, %vm798
    %v800 = vsel %vm799, %v791, %v796
    %v801 = vmul.f32 %v767, %v790
    %v802 = vmul.f32 %v768, %v800
    %v803 = vld [vmem:[%s4 + $0x17] sm:$0x1]
    %v804 = vperm.slane %v803, 0
    %v805 = vmul.f32 %v801, %v804
    %v806 = vmul.f32 %v802, %v804
    %v807 = vld [vmem:[%s4 + $0x18] sm:$0x1]
    %v808 = vperm.slane %v807, 0
    %v809 = vadd.f32 %v805, %v808
    %v810 = vadd.f32 %v806, %v808
    %v811 = vld [vmem:[#allocation2 + $0x8] sm:$0xf]
    %v812 = vld [vmem:[#allocation2 + $0x20] sm:$0xf]
    %v813 = vld [vmem:[#allocation2 + $0x38] sm:$0xf]
    %v814 = vld [vmem:[#allocation2 + $0x50] sm:$0xf]
    %v815 = vpack.c.bf16 %v810, %v809
    %v816 = vld [vmem:[%s4 + $0x12] sm:$0x1]
    %v817 = vperm.slane %v816, 0
    %v822 = vunpack.c.l.b16 %v811
    %v823 = vunpack.c.l.b16 %v812
    %v824 = vunpack.c.l.b16 %v813
    %v825 = vunpack.c.l.b16 %v814
    %v826 = vpack.c.b16 %v823, %v822
    %v827 = vpack.c.b16 %v825, %v824
    %v831 = vsel %vm72, %v815, 0
    %833 = vmatpush.bf16.msra.mxu0 0
    %834 = vmatpush.bf16.msra.mxu0 0
    %835 = vmatpush.bf16.msra.mxu0 0
    %836 = vmatpush.bf16.msra.mxu0 0
    %837 = vmatpush.bf16.msra.mxu0 0
    %838 = vmatpush.bf16.msra.mxu0 0
    %839 = vmatpush.bf16.msra.mxu0 %v827
    %840 = vmatpush.bf16.msra.mxu0 %v826
    %841 = vmatmul.bf16.gmra.mxu0 %v831
    %v842 = vpop.f32.mrf.mxu0
    %v843 = vadd.f32 %v817, %v842
    %v844 = vpop.f32.mrf.mxu0
    %v845 = vadd.f32 %v817, %v844
    %846 = vdwg.mxu0
    %v847 = vld [vmem:[#allocation2 + $0xc] sm:$0xf]
    %v848 = vld [vmem:[#allocation2 + $0x24] sm:$0xf]
    %v849 = vld [vmem:[#allocation2 + $0x3c] sm:$0xf]
    %v850 = vld [vmem:[#allocation2 + $0x54] sm:$0xf]
    %v851 = vpack.c.bf16 %v46, %v45
    %v852 = vpack.c.bf16 %v48, %v47
    %v853 = vld [vmem:[%s4 + $0x13] sm:$0x1]
    %v854 = vperm.slane %v853, 0
    %v859 = vunpack.c.l.b16 %v847
    %v860 = vunpack.c.l.b16 %v848
    %v861 = vunpack.c.l.b16 %v849
    %v862 = vunpack.c.l.b16 %v850
    %v863 = vpack.c.b16 %v860, %v859
    %v864 = vpack.c.b16 %v862, %v861
    %v868 = vsel %vm72, %v851, 0
    %v871 = vsel %vm72, %v852, 0
    %873 = vmatpush.bf16.msra.mxu0 0
    %874 = vmatpush.bf16.msra.mxu0 0
    %875 = vmatpush.bf16.msra.mxu0 0
    %876 = vmatpush.bf16.msra.mxu0 0
    %877 = vmatpush.bf16.msra.mxu0 0
    %878 = vmatpush.bf16.msra.mxu0 0
    %879 = vmatpush.bf16.msra.mxu0 %v864
    %880 = vmatpush.bf16.msra.mxu0 %v863
    %881 = vmatmul.bf16.gmra.mxu0 %v868
    %v882 = vpop.f32.mrf.mxu0
    %v883 = vadd.f32 %v854, %v882
    %v884 = vpop.f32.mrf.mxu0
    %v885 = vadd.f32 %v854, %v884
    %886 = vmatmul.bf16.gmra.mxu0 %v871
    %v887 = vpop.f32.mrf.mxu0
    %v888 = vadd.f32 %v854, %v887
    %v889 = vpop.f32.mrf.mxu0
    %v890 = vadd.f32 %v854, %v889
    %891 = vdwg.mxu0
    %v892 = vld [vmem:[#allocation2 + $0x10] sm:$0xf]
    %v893 = vld [vmem:[#allocation2 + $0x28] sm:$0xf]
    %v894 = vld [vmem:[#allocation2 + $0x40] sm:$0xf]
    %v895 = vld [vmem:[#allocation2 + $0x58] sm:$0xf]
    %v896 = vld [vmem:[%s4 + $0x14] sm:$0x1]
    %v897 = vpack.c.bf16 %v843, %v843
    %v898 = vpack.c.bf16 %v883, %v883
    %v899 = vpack.c.bf16 %v885, %v885
    %v902 = vunpack.c.l.b16 %v898
    %v903 = vunpack.c.l.b16 %v899
    %v904 = vpack.c.b16 %v903, %v902
    %v906 = vsel %vm101, %v897, 0
    %v909 = vsel %vm101, %v904, 0
    %911 = vmatpush.bf16.xpose.msra.mxu0 0
    %912 = vmatpush.bf16.xpose.msra.mxu0 0
    %913 = vmatpush.bf16.xpose.msra.mxu0 0
    %914 = vmatpush.bf16.xpose.msra.mxu0 0
    %915 = vmatpush.bf16.xpose.msra.mxu0 0
    %916 = vmatpush.bf16.xpose.msra.mxu0 0
    %917 = vmatpush.bf16.xpose.msra.mxu0 0
    %918 = vmatpush.bf16.xpose.msra.mxu0 %v909
    %919 = vmatmul.bf16.gmra.mxu0 %v906
    %v920 = vpop.f32.mrf.mxu0
    %v921 = vadd.f32 0.0, %v920
    %v922 = vpop.f32.mrf.mxu0
    %923 = vdwg.mxu0
    %v924 = vmul.f32 %v921, 0.35355338
    %v925 = vsel %vm396, %v924, -inf
    %926 = vmax.xlane.f32.xlu0 %v925
    %v927 = vpop.xlane.xlu0 %926
    %v928 = vsub.f32 %v924, %v927
    %v929 = vmul.f32 %v928, 1.442695
    %v930 = vpow.pop %v929
    %v931 = vsel %vm396, %v930, 0.0
    %932 = vadd.xlane.f32.xlu0 %v931
    %v933 = vpop.xlane.xlu0 %932
    %v934 = vrcp.pop %v933
    %v935 = vmul.f32 %v933, %v934
    %v936 = vsub.f32 1.0, %v935
    %v937 = vmul.f32 %v934, %v936
    %v938 = vadd.f32 %v934, %v937
    %vm939 = vweird.f32 %v933
    %vm940 = vweird.f32 %v934
    %vm941 = vmor %vm939, %vm940
    %v942 = vsel %vm941, %v934, %v938
    %v943 = vand.u32 2147483647, %v933
    %vm944 = vcmp.eq.f32.partialorder %v943, 8.507059e+37
    %v945 = vand.u32 %v933, 2147483648
    %v946 = vor.u32 1.1754944e-38, %v945
    %v947 = vsel %vm944, %v946, %v942
    %v948 = vmul.f32 %v930, %v947
    %v949 = vpack.c.bf16 %v948, %v948
    %950 = vrot.lane.b32.xlu0 %v904, 96
    %v951 = vpop.permute.xlu0 %950
    %v954 = vsel %vm396, %v949, 0
    %956 = vmatpush.bf16.msra.mxu0 0
    %957 = vmatpush.bf16.msra.mxu0 0
    %958 = vmatpush.bf16.msra.mxu0 0
    %959 = vmatpush.bf16.msra.mxu0 0
    %960 = vmatpush.bf16.msra.mxu0 0
    %961 = vmatpush.bf16.msra.mxu0 0
    %962 = vmatpush.bf16.msra.mxu0 0
    %963 = vmatpush.bf16.msra.mxu0 %v951
    %964 = vmatmul.bf16.gmra.mxu0 %v954
    %v965 = vpop.f32.mrf.mxu0
    %v966 = vadd.f32 0.0, %v965
    %v967 = vpop.f32.mrf.mxu0
    %968 = vdwg.mxu0
    %v970 = vunpack.c.l.b16 %v897
    %v971 = vpack.c.b16 %v970, %v970
    %972 = vrot.lane.b32.xlu0 %v971, 120
    %v973 = vpop.permute.xlu0 %972
    %974 = vrot.lane.b32.xlu0 %v904, 120
    %v975 = vpop.permute.xlu0 %974
    %v977 = vsel %vm101, %v973, 0
    %v980 = vsel %vm101, %v975, 0
    %982 = vmatpush.bf16.xpose.msra.mxu0 0
    %983 = vmatpush.bf16.xpose.msra.mxu0 0
    %984 = vmatpush.bf16.xpose.msra.mxu0 0
    %985 = vmatpush.bf16.xpose.msra.mxu0 0
    %986 = vmatpush.bf16.xpose.msra.mxu0 0
    %987 = vmatpush.bf16.xpose.msra.mxu0 0
    %988 = vmatpush.bf16.xpose.msra.mxu0 0
    %989 = vmatpush.bf16.xpose.msra.mxu0 %v980
    %990 = vmatmul.bf16.gmra.mxu0 %v977
    %v991 = vpop.f32.mrf.mxu0
    %v992 = vadd.f32 0.0, %v991
    %v993 = vpop.f32.mrf.mxu0
    %994 = vdwg.mxu0
    %v995 = vmul.f32 %v992, 0.35355338
    %v996 = vsel %vm396, %v995, -inf
    %997 = vmax.xlane.f32.xlu0 %v996
    %v998 = vpop.xlane.xlu0 %997
    %v999 = vsub.f32 %v995, %v998
    %v1000 = vmul.f32 %v999, 1.442695
    %v1001 = vpow.pop %v1000
    %v1002 = vsel %vm396, %v1001, 0.0
    %1003 = vadd.xlane.f32.xlu0 %v1002
    %v1004 = vpop.xlane.xlu0 %1003
    %v1005 = vrcp.pop %v1004
    %v1006 = vmul.f32 %v1004, %v1005
    %v1007 = vsub.f32 1.0, %v1006
    %v1008 = vmul.f32 %v1005, %v1007
    %v1009 = vadd.f32 %v1005, %v1008
    %vm1010 = vweird.f32 %v1004
    %vm1011 = vweird.f32 %v1005
    %vm1012 = vmor %vm1010, %vm1011
    %v1013 = vsel %vm1012, %v1005, %v1009
    %v1014 = vand.u32 2147483647, %v1004
    %vm1015 = vcmp.eq.f32.partialorder %v1014, 8.507059e+37
    %v1016 = vand.u32 %v1004, 2147483648
    %v1017 = vor.u32 1.1754944e-38, %v1016
    %v1018 = vsel %vm1015, %v1017, %v1013
    %v1019 = vmul.f32 %v1001, %v1018
    %v1020 = vpack.c.bf16 %v1019, %v1019
    %1021 = vrot.lane.b32.xlu0 %v904, 88
    %v1022 = vpop.permute.xlu0 %1021
    %v1025 = vsel %vm396, %v1020, 0
    %1027 = vmatpush.bf16.msra.mxu0 0
    %1028 = vmatpush.bf16.msra.mxu0 0
    %1029 = vmatpush.bf16.msra.mxu0 0
    %1030 = vmatpush.bf16.msra.mxu0 0
    %1031 = vmatpush.bf16.msra.mxu0 0
    %1032 = vmatpush.bf16.msra.mxu0 0
    %1033 = vmatpush.bf16.msra.mxu0 0
    %1034 = vmatpush.bf16.msra.mxu0 %v1022
    %1035 = vmatmul.bf16.gmra.mxu0 %v1025
    %v1036 = vpop.f32.mrf.mxu0
    %v1037 = vadd.f32 0.0, %v1036
    %v1038 = vpop.f32.mrf.mxu0
    %1039 = vdwg.mxu0
    %1040 = vrot.lane.b32.xlu0 %v971, 112
    %v1041 = vpop.permute.xlu0 %1040
    %1042 = vrot.lane.b32.xlu0 %v904, 112
    %v1043 = vpop.permute.xlu0 %1042
    %v1045 = vsel %vm101, %v1041, 0
    %v1048 = vsel %vm101, %v1043, 0
    %1050 = vmatpush.bf16.xpose.msra.mxu0 0
    %1051 = vmatpush.bf16.xpose.msra.mxu0 0
    %1052 = vmatpush.bf16.xpose.msra.mxu0 0
    %1053 = vmatpush.bf16.xpose.msra.mxu0 0
    %1054 = vmatpush.bf16.xpose.msra.mxu0 0
    %1055 = vmatpush.bf16.xpose.msra.mxu0 0
    %1056 = vmatpush.bf16.xpose.msra.mxu0 0
    %1057 = vmatpush.bf16.xpose.msra.mxu0 %v1048
    %1058 = vmatmul.bf16.gmra.mxu0 %v1045
    %v1059 = vpop.f32.mrf.mxu0
    %v1060 = vadd.f32 0.0, %v1059
    %v1061 = vpop.f32.mrf.mxu0
    %1062 = vdwg.mxu0
    %v1063 = vmul.f32 %v1060, 0.35355338
    %v1064 = vsel %vm396, %v1063, -inf
    %1065 = vmax.xlane.f32.xlu0 %v1064
    %v1066 = vpop.xlane.xlu0 %1065
    %v1067 = vsub.f32 %v1063, %v1066
    %v1068 = vmul.f32 %v1067, 1.442695
    %v1069 = vpow.pop %v1068
    %v1070 = vsel %vm396, %v1069, 0.0
    %1071 = vadd.xlane.f32.xlu0 %v1070
    %v1072 = vpop.xlane.xlu0 %1071
    %v1073 = vrcp.pop %v1072
    %v1074 = vmul.f32 %v1072, %v1073
    %v1075 = vsub.f32 1.0, %v1074
    %v1076 = vmul.f32 %v1073, %v1075
    %v1077 = vadd.f32 %v1073, %v1076
    %vm1078 = vweird.f32 %v1072
    %vm1079 = vweird.f32 %v1073
    %vm1080 = vmor %vm1078, %vm1079
    %v1081 = vsel %vm1080, %v1073, %v1077
    %v1082 = vand.u32 2147483647, %v1072
    %vm1083 = vcmp.eq.f32.partialorder %v1082, 8.507059e+37
    %v1084 = vand.u32 %v1072, 2147483648
    %v1085 = vor.u32 1.1754944e-38, %v1084
    %v1086 = vsel %vm1083, %v1085, %v1081
    %v1087 = vmul.f32 %v1069, %v1086
    %v1088 = vpack.c.bf16 %v1087, %v1087
    %1089 = vrot.lane.b32.xlu0 %v904, 80
    %v1090 = vpop.permute.xlu0 %1089
    %v1093 = vsel %vm396, %v1088, 0
    %1095 = vmatpush.bf16.msra.mxu0 0
    %1096 = vmatpush.bf16.msra.mxu0 0
    %1097 = vmatpush.bf16.msra.mxu0 0
    %1098 = vmatpush.bf16.msra.mxu0 0
    %1099 = vmatpush.bf16.msra.mxu0 0
    %1100 = vmatpush.bf16.msra.mxu0 0
    %1101 = vmatpush.bf16.msra.mxu0 0
    %1102 = vmatpush.bf16.msra.mxu0 %v1090
    %1103 = vmatmul.bf16.gmra.mxu0 %v1093
    %v1104 = vpop.f32.mrf.mxu0
    %v1105 = vadd.f32 0.0, %v1104
    %v1106 = vpop.f32.mrf.mxu0
    %1107 = vdwg.mxu0
    %1108 = vrot.lane.b32.xlu0 %v971, 104
    %v1109 = vpop.permute.xlu0 %1108
    %1110 = vrot.lane.b32.xlu0 %v904, 104
    %v1111 = vpop.permute.xlu0 %1110
    %v1113 = vsel %vm101, %v1109, 0
    %v1116 = vsel %vm101, %v1111, 0
    %1118 = vmatpush.bf16.xpose.msra.mxu0 0
    %1119 = vmatpush.bf16.xpose.msra.mxu0 0
    %1120 = vmatpush.bf16.xpose.msra.mxu0 0
    %1121 = vmatpush.bf16.xpose.msra.mxu0 0
    %1122 = vmatpush.bf16.xpose.msra.mxu0 0
    %1123 = vmatpush.bf16.xpose.msra.mxu0 0
    %1124 = vmatpush.bf16.xpose.msra.mxu0 0
    %1125 = vmatpush.bf16.xpose.msra.mxu0 %v1116
    %1126 = vmatmul.bf16.gmra.mxu0 %v1113
    %v1127 = vpop.f32.mrf.mxu0
    %v1128 = vadd.f32 0.0, %v1127
    %v1129 = vpop.f32.mrf.mxu0
    %1130 = vdwg.mxu0
    %v1131 = vmul.f32 %v1128, 0.35355338
    %v1132 = vsel %vm396, %v1131, -inf
    %1133 = vmax.xlane.f32.xlu0 %v1132
    %v1134 = vpop.xlane.xlu0 %1133
    %v1135 = vsub.f32 %v1131, %v1134
    %v1136 = vmul.f32 %v1135, 1.442695
    %v1137 = vpow.pop %v1136
    %v1138 = vsel %vm396, %v1137, 0.0
    %1139 = vadd.xlane.f32.xlu0 %v1138
    %v1140 = vpop.xlane.xlu0 %1139
    %v1141 = vrcp.pop %v1140
    %v1142 = vmul.f32 %v1140, %v1141
    %v1143 = vsub.f32 1.0, %v1142
    %v1144 = vmul.f32 %v1141, %v1143
    %v1145 = vadd.f32 %v1141, %v1144
    %vm1146 = vweird.f32 %v1140
    %vm1147 = vweird.f32 %v1141
    %vm1148 = vmor %vm1146, %vm1147
    %v1149 = vsel %vm1148, %v1141, %v1145
    %v1150 = vand.u32 2147483647, %v1140
    %vm1151 = vcmp.eq.f32.partialorder %v1150, 8.507059e+37
    %v1152 = vand.u32 %v1140, 2147483648
    %v1153 = vor.u32 1.1754944e-38, %v1152
    %v1154 = vsel %vm1151, %v1153, %v1149
    %v1155 = vmul.f32 %v1137, %v1154
    %v1156 = vpack.c.bf16 %v1155, %v1155
    %1157 = vrot.lane.b32.xlu0 %v904, 72
    %v1158 = vpop.permute.xlu0 %1157
    %v1161 = vsel %vm396, %v1156, 0
    %1163 = vmatpush.bf16.msra.mxu0 0
    %1164 = vmatpush.bf16.msra.mxu0 0
    %1165 = vmatpush.bf16.msra.mxu0 0
    %1166 = vmatpush.bf16.msra.mxu0 0
    %1167 = vmatpush.bf16.msra.mxu0 0
    %1168 = vmatpush.bf16.msra.mxu0 0
    %1169 = vmatpush.bf16.msra.mxu0 0
    %1170 = vmatpush.bf16.msra.mxu0 %v1158
    %1171 = vmatmul.bf16.gmra.mxu0 %v1161
    %v1172 = vpop.f32.mrf.mxu0
    %v1173 = vadd.f32 0.0, %v1172
    %v1174 = vpop.f32.mrf.mxu0
    %1175 = vdwg.mxu0
    %1177 = vrot.lane.b32.xlu0 %v1037, 8
    %v1178 = vpop.permute.xlu0 %1177
    %1181 = vrot.lane.b32.xlu0 %v1105, 16
    %v1182 = vpop.permute.xlu0 %1181
    %1185 = vrot.lane.b32.xlu0 %v1173, 24
    %v1186 = vpop.permute.xlu0 %1185
    %v1188 = vsel %vm101, %v966, %v1178
    %v1189 = vsel %vm396, %v1188, %v1182
    %v1190 = vsel %vm398, %v1189, %v1186
    %v1191 = vpack.c.bf16 %v1190, %v1190
    %v1196 = vunpack.c.l.b16 %v892
    %v1197 = vunpack.c.l.b16 %v893
    %v1198 = vunpack.c.l.b16 %v894
    %v1199 = vunpack.c.l.b16 %v895
    %v1200 = vpack.c.b16 %v1197, %v1196
    %v1201 = vpack.c.b16 %v1199, %v1198
    %v1205 = vsel %vm72, %v1191, 0
    %1207 = vmatpush.bf16.msra.mxu0 0
    %1208 = vmatpush.bf16.msra.mxu0 0
    %1209 = vmatpush.bf16.msra.mxu0 0
    %1210 = vmatpush.bf16.msra.mxu0 0
    %1211 = vmatpush.bf16.msra.mxu0 0
    %1212 = vmatpush.bf16.msra.mxu0 0
    %1213 = vmatpush.bf16.msra.mxu0 %v1201
    %1214 = vmatpush.bf16.msra.mxu0 %v1200
    %1215 = vmatmul.bf16.gmra.mxu0 %v1205
    %v1216 = vpop.f32.mrf.mxu0
    %v1217 = vadd.f32 0.0, %v1216
    %v1218 = vpop.f32.mrf.mxu0
    %1219 = vdwg.mxu0
    %v1220 = vpack.c.bf16 %v845, %v845
    %v1221 = vpack.c.bf16 %v888, %v888
    %v1222 = vpack.c.bf16 %v890, %v890
    %v1225 = vunpack.c.l.b16 %v1221
    %v1226 = vunpack.c.l.b16 %v1222
    %v1227 = vpack.c.b16 %v1226, %v1225
    %v1229 = vsel %vm101, %v1220, 0
    %v1232 = vsel %vm101, %v1227, 0
    %1234 = vmatpush.bf16.xpose.msra.mxu0 0
    %1235 = vmatpush.bf16.xpose.msra.mxu0 0
    %1236 = vmatpush.bf16.xpose.msra.mxu0 0
    %1237 = vmatpush.bf16.xpose.msra.mxu0 0
    %1238 = vmatpush.bf16.xpose.msra.mxu0 0
    %1239 = vmatpush.bf16.xpose.msra.mxu0 0
    %1240 = vmatpush.bf16.xpose.msra.mxu0 0
    %1241 = vmatpush.bf16.xpose.msra.mxu0 %v1232
    %1242 = vmatmul.bf16.gmra.mxu0 %v1229
    %v1243 = vpop.f32.mrf.mxu0
    %v1244 = vadd.f32 0.0, %v1243
    %v1245 = vpop.f32.mrf.mxu0
    %1246 = vdwg.mxu0
    %v1247 = vmul.f32 %v1244, 0.35355338
    %v1248 = vsel %vm396, %v1247, -inf
    %1249 = vmax.xlane.f32.xlu0 %v1248
    %v1250 = vpop.xlane.xlu0 %1249
    %v1251 = vsub.f32 %v1247, %v1250
    %v1252 = vmul.f32 %v1251, 1.442695
    %v1253 = vpow.pop %v1252
    %v1254 = vsel %vm396, %v1253, 0.0
    %1255 = vadd.xlane.f32.xlu0 %v1254
    %v1256 = vpop.xlane.xlu0 %1255
    %v1257 = vrcp.pop %v1256
    %v1258 = vmul.f32 %v1256, %v1257
    %v1259 = vsub.f32 1.0, %v1258
    %v1260 = vmul.f32 %v1257, %v1259
    %v1261 = vadd.f32 %v1257, %v1260
    %vm1262 = vweird.f32 %v1256
    %vm1263 = vweird.f32 %v1257
    %vm1264 = vmor %vm1262, %vm1263
    %v1265 = vsel %vm1264, %v1257, %v1261
    %v1266 = vand.u32 2147483647, %v1256
    %vm1267 = vcmp.eq.f32.partialorder %v1266, 8.507059e+37
    %v1268 = vand.u32 %v1256, 2147483648
    %v1269 = vor.u32 1.1754944e-38, %v1268
    %v1270 = vsel %vm1267, %v1269, %v1265
    %v1271 = vmul.f32 %v1253, %v1270
    %v1272 = vpack.c.bf16 %v1271, %v1271
    %1273 = vrot.lane.b32.xlu0 %v1227, 96
    %v1274 = vpop.permute.xlu0 %1273
    %v1277 = vsel %vm396, %v1272, 0
    %1279 = vmatpush.bf16.msra.mxu0 0
    %1280 = vmatpush.bf16.msra.mxu0 0
    %1281 = vmatpush.bf16.msra.mxu0 0
    %1282 = vmatpush.bf16.msra.mxu0 0
    %1283 = vmatpush.bf16.msra.mxu0 0
    %1284 = vmatpush.bf16.msra.mxu0 0
    %1285 = vmatpush.bf16.msra.mxu0 0
    %1286 = vmatpush.bf16.msra.mxu0 %v1274
    %1287 = vmatmul.bf16.gmra.mxu0 %v1277
    %v1288 = vpop.f32.mrf.mxu0
    %v1289 = vadd.f32 0.0, %v1288
    %v1290 = vpop.f32.mrf.mxu0
    %1291 = vdwg.mxu0
    %v1293 = vunpack.c.l.b16 %v1220
    %v1294 = vpack.c.b16 %v1293, %v1293
    %1295 = vrot.lane.b32.xlu0 %v1294, 120
    %v1296 = vpop.permute.xlu0 %1295
    %1297 = vrot.lane.b32.xlu0 %v1227, 120
    %v1298 = vpop.permute.xlu0 %1297
    %v1300 = vsel %vm101, %v1296, 0
    %v1303 = vsel %vm101, %v1298, 0
    %1305 = vmatpush.bf16.xpose.msra.mxu0 0
    %1306 = vmatpush.bf16.xpose.msra.mxu0 0
    %1307 = vmatpush.bf16.xpose.msra.mxu0 0
    %1308 = vmatpush.bf16.xpose.msra.mxu0 0
    %1309 = vmatpush.bf16.xpose.msra.mxu0 0
    %1310 = vmatpush.bf16.xpose.msra.mxu0 0
    %1311 = vmatpush.bf16.xpose.msra.mxu0 0
    %1312 = vmatpush.bf16.xpose.msra.mxu0 %v1303
    %1313 = vmatmul.bf16.gmra.mxu0 %v1300
    %v1314 = vpop.f32.mrf.mxu0
    %v1315 = vadd.f32 0.0, %v1314
    %v1316 = vpop.f32.mrf.mxu0
    %1317 = vdwg.mxu0
    %v1318 = vmul.f32 %v1315, 0.35355338
    %v1319 = vsel %vm396, %v1318, -inf
    %1320 = vmax.xlane.f32.xlu0 %v1319
    %v1321 = vpop.xlane.xlu0 %1320
    %v1322 = vsub.f32 %v1318, %v1321
    %v1323 = vmul.f32 %v1322, 1.442695
    %v1324 = vpow.pop %v1323
    %v1325 = vsel %vm396, %v1324, 0.0
    %1326 = vadd.xlane.f32.xlu0 %v1325
    %v1327 = vpop.xlane.xlu0 %1326
    %v1328 = vrcp.pop %v1327
    %v1329 = vmul.f32 %v1327, %v1328
    %v1330 = vsub.f32 1.0, %v1329
    %v1331 = vmul.f32 %v1328, %v1330
    %v1332 = vadd.f32 %v1328, %v1331
    %vm1333 = vweird.f32 %v1327
    %vm1334 = vweird.f32 %v1328
    %vm1335 = vmor %vm1333, %vm1334
    %v1336 = vsel %vm1335, %v1328, %v1332
    %v1337 = vand.u32 2147483647, %v1327
    %vm1338 = vcmp.eq.f32.partialorder %v1337, 8.507059e+37
    %v1339 = vand.u32 %v1327, 2147483648
    %v1340 = vor.u32 1.1754944e-38, %v1339
    %v1341 = vsel %vm1338, %v1340, %v1336
    %v1342 = vmul.f32 %v1324, %v1341
    %v1343 = vpack.c.bf16 %v1342, %v1342
    %1344 = vrot.lane.b32.xlu0 %v1227, 88
    %v1345 = vpop.permute.xlu0 %1344
    %v1348 = vsel %vm396, %v1343, 0
    %1350 = vmatpush.bf16.msra.mxu0 0
    %1351 = vmatpush.bf16.msra.mxu0 0
    %1352 = vmatpush.bf16.msra.mxu0 0
    %1353 = vmatpush.bf16.msra.mxu0 0
    %1354 = vmatpush.bf16.msra.mxu0 0
    %1355 = vmatpush.bf16.msra.mxu0 0
    %1356 = vmatpush.bf16.msra.mxu0 0
    %1357 = vmatpush.bf16.msra.mxu0 %v1345
    %1358 = vmatmul.bf16.gmra.mxu0 %v1348
    %v1359 = vpop.f32.mrf.mxu0
    %v1360 = vadd.f32 0.0, %v1359
    %v1361 = vpop.f32.mrf.mxu0
    %1362 = vdwg.mxu0
    %1363 = vrot.lane.b32.xlu0 %v1294, 112
    %v1364 = vpop.permute.xlu0 %1363
    %1365 = vrot.lane.b32.xlu0 %v1227, 112
    %v1366 = vpop.permute.xlu0 %1365
    %v1368 = vsel %vm101, %v1364, 0
    %v1371 = vsel %vm101, %v1366, 0
    %1373 = vmatpush.bf16.xpose.msra.mxu0 0
    %1374 = vmatpush.bf16.xpose.msra.mxu0 0
    %1375 = vmatpush.bf16.xpose.msra.mxu0 0
    %1376 = vmatpush.bf16.xpose.msra.mxu0 0
    %1377 = vmatpush.bf16.xpose.msra.mxu0 0
    %1378 = vmatpush.bf16.xpose.msra.mxu0 0
    %1379 = vmatpush.bf16.xpose.msra.mxu0 0
    %1380 = vmatpush.bf16.xpose.msra.mxu0 %v1371
    %1381 = vmatmul.bf16.gmra.mxu0 %v1368
    %v1382 = vpop.f32.mrf.mxu0
    %v1383 = vadd.f32 0.0, %v1382
    %v1384 = vpop.f32.mrf.mxu0
    %1385 = vdwg.mxu0
    %v1386 = vmul.f32 %v1383, 0.35355338
    %v1387 = vsel %vm396, %v1386, -inf
    %1388 = vmax.xlane.f32.xlu0 %v1387
    %v1389 = vpop.xlane.xlu0 %1388
    %v1390 = vsub.f32 %v1386, %v1389
    %v1391 = vmul.f32 %v1390, 1.442695
    %v1392 = vpow.pop %v1391
    %v1393 = vsel %vm396, %v1392, 0.0
    %1394 = vadd.xlane.f32.xlu0 %v1393
    %v1395 = vpop.xlane.xlu0 %1394
    %v1396 = vrcp.pop %v1395
    %v1397 = vmul.f32 %v1395, %v1396
    %v1398 = vsub.f32 1.0, %v1397
    %v1399 = vmul.f32 %v1396, %v1398
    %v1400 = vadd.f32 %v1396, %v1399
    %vm1401 = vweird.f32 %v1395
    %vm1402 = vweird.f32 %v1396
    %vm1403 = vmor %vm1401, %vm1402
    %v1404 = vsel %vm1403, %v1396, %v1400
    %v1405 = vand.u32 2147483647, %v1395
    %vm1406 = vcmp.eq.f32.partialorder %v1405, 8.507059e+37
    %v1407 = vand.u32 %v1395, 2147483648
    %v1408 = vor.u32 1.1754944e-38, %v1407
    %v1409 = vsel %vm1406, %v1408, %v1404
    %v1410 = vmul.f32 %v1392, %v1409
    %v1411 = vpack.c.bf16 %v1410, %v1410
    %1412 = vrot.lane.b32.xlu0 %v1227, 80
    %v1413 = vpop.permute.xlu0 %1412
    %v1416 = vsel %vm396, %v1411, 0
    %1418 = vmatpush.bf16.msra.mxu0 0
    %1419 = vmatpush.bf16.msra.mxu0 0
    %1420 = vmatpush.bf16.msra.mxu0 0
    %1421 = vmatpush.bf16.msra.mxu0 0
    %1422 = vmatpush.bf16.msra.mxu0 0
    %1423 = vmatpush.bf16.msra.mxu0 0
    %1424 = vmatpush.bf16.msra.mxu0 0
    %1425 = vmatpush.bf16.msra.mxu0 %v1413
    %1426 = vmatmul.bf16.gmra.mxu0 %v1416
    %v1427 = vpop.f32.mrf.mxu0
    %v1428 = vadd.f32 0.0, %v1427
    %v1429 = vpop.f32.mrf.mxu0
    %1430 = vdwg.mxu0
    %1431 = vrot.lane.b32.xlu0 %v1294, 104
    %v1432 = vpop.permute.xlu0 %1431
    %1433 = vrot.lane.b32.xlu0 %v1227, 104
    %v1434 = vpop.permute.xlu0 %1433
    %v1436 = vsel %vm101, %v1432, 0
    %v1439 = vsel %vm101, %v1434, 0
    %1441 = vmatpush.bf16.xpose.msra.mxu0 0
    %1442 = vmatpush.bf16.xpose.msra.mxu0 0
    %1443 = vmatpush.bf16.xpose.msra.mxu0 0
    %1444 = vmatpush.bf16.xpose.msra.mxu0 0
    %1445 = vmatpush.bf16.xpose.msra.mxu0 0
    %1446 = vmatpush.bf16.xpose.msra.mxu0 0
    %1447 = vmatpush.bf16.xpose.msra.mxu0 0
    %1448 = vmatpush.bf16.xpose.msra.mxu0 %v1439
    %1449 = vmatmul.bf16.gmra.mxu0 %v1436
    %v1450 = vpop.f32.mrf.mxu0
    %v1451 = vadd.f32 0.0, %v1450
    %v1452 = vpop.f32.mrf.mxu0
    %1453 = vdwg.mxu0
    %v1454 = vmul.f32 %v1451, 0.35355338
    %v1455 = vsel %vm396, %v1454, -inf
    %1456 = vmax.xlane.f32.xlu0 %v1455
    %v1457 = vpop.xlane.xlu0 %1456
    %v1458 = vsub.f32 %v1454, %v1457
    %v1459 = vmul.f32 %v1458, 1.442695
    %v1460 = vpow.pop %v1459
    %v1461 = vsel %vm396, %v1460, 0.0
    %1462 = vadd.xlane.f32.xlu0 %v1461
    %v1463 = vpop.xlane.xlu0 %1462
    %v1464 = vrcp.pop %v1463
    %v1465 = vmul.f32 %v1463, %v1464
    %v1466 = vsub.f32 1.0, %v1465
    %v1467 = vmul.f32 %v1464, %v1466
    %v1468 = vadd.f32 %v1464, %v1467
    %vm1469 = vweird.f32 %v1463
    %vm1470 = vweird.f32 %v1464
    %vm1471 = vmor %vm1469, %vm1470
    %v1472 = vsel %vm1471, %v1464, %v1468
    %v1473 = vand.u32 2147483647, %v1463
    %vm1474 = vcmp.eq.f32.partialorder %v1473, 8.507059e+37
    %v1475 = vand.u32 %v1463, 2147483648
    %v1476 = vor.u32 1.1754944e-38, %v1475
    %v1477 = vsel %vm1474, %v1476, %v1472
    %v1478 = vmul.f32 %v1460, %v1477
    %v1479 = vpack.c.bf16 %v1478, %v1478
    %1480 = vrot.lane.b32.xlu0 %v1227, 72
    %v1481 = vpop.permute.xlu0 %1480
    %v1484 = vsel %vm396, %v1479, 0
    %1486 = vmatpush.bf16.msra.mxu0 0
    %1487 = vmatpush.bf16.msra.mxu0 0
    %1488 = vmatpush.bf16.msra.mxu0 0
    %1489 = vmatpush.bf16.msra.mxu0 0
    %1490 = vmatpush.bf16.msra.mxu0 0
    %1491 = vmatpush.bf16.msra.mxu0 0
    %1492 = vmatpush.bf16.msra.mxu0 0
    %1493 = vmatpush.bf16.msra.mxu0 %v1481
    %1494 = vmatmul.bf16.gmra.mxu0 %v1484
    %v1495 = vpop.f32.mrf.mxu0
    %v1496 = vadd.f32 0.0, %v1495
    %v1497 = vpop.f32.mrf.mxu0
    %1498 = vdwg.mxu0
    %1500 = vrot.lane.b32.xlu0 %v1360, 8
    %v1501 = vpop.permute.xlu0 %1500
    %1504 = vrot.lane.b32.xlu0 %v1428, 16
    %v1505 = vpop.permute.xlu0 %1504
    %1508 = vrot.lane.b32.xlu0 %v1496, 24
    %v1509 = vpop.permute.xlu0 %1508
    %v1511 = vsel %vm101, %v1289, %v1501
    %v1512 = vsel %vm396, %v1511, %v1505
    %v1513 = vsel %vm398, %v1512, %v1509
    %v1514 = vpack.c.bf16 %v1513, %v1513
    %v1516 = vsel %vm72, %v1514, 0
    %1518 = vmatpush.bf16.msra.mxu0 0
    %1519 = vmatpush.bf16.msra.mxu0 0
    %1520 = vmatpush.bf16.msra.mxu0 0
    %1521 = vmatpush.bf16.msra.mxu0 0
    %1522 = vmatpush.bf16.msra.mxu0 0
    %1523 = vmatpush.bf16.msra.mxu0 0
    %1524 = vmatpush.bf16.msra.mxu0 %v1201
    %1525 = vmatpush.bf16.msra.mxu0 %v1200
    %1526 = vmatmul.bf16.gmra.mxu0 %v1516
    %v1527 = vpop.f32.mrf.mxu0
    %v1528 = vadd.f32 0.0, %v1527
    %v1529 = vpop.f32.mrf.mxu0
    %1530 = vdwg.mxu0
    %v1531 = vperm.slane %v896, 0
    %v1532 = vadd.f32 %v1217, %v1531
    %v1533 = vadd.f32 %v1528, %v1531
    %v1534 = vadd.f32 %v809, %v1532
    %v1535 = vadd.f32 %v810, %v1533
    %v1536 = vsel %vm72, %v1534, 0.0
    %1537 = vadd.xlane.f32.xlu0 %v1536
    %v1538 = vpop.xlane.xlu0 %1537
    %v1539 = vsel %vm72, %v1535, 0.0
    %1540 = vadd.xlane.f32.xlu0 %v1539
    %v1541 = vpop.xlane.xlu0 %1540
    %v1542 = vmul.f32 %v1538, %v764
    %v1543 = vmul.f32 %v1541, %v764
    %v1544 = vsub.f32 %v1534, %v1542
    %v1545 = vsub.f32 %v1535, %v1543
    %v1546 = vmul.f32 %v1544, %v1544
    %v1547 = vmul.f32 %v1545, %v1545
    %v1548 = vsel %vm72, %v1546, 0.0
    %1549 = vadd.xlane.f32.xlu0 %v1548
    %v1550 = vpop.xlane.xlu0 %1549
    %v1551 = vsel %vm72, %v1547, 0.0
    %1552 = vadd.xlane.f32.xlu0 %v1551
    %v1553 = vpop.xlane.xlu0 %1552
    %v1554 = vmul.f32 %v1550, %v764
    %v1555 = vmul.f32 %v1553, %v764
    %v1556 = vadd.f32 %v1554, 1e-05
    %v1557 = vadd.f32 %v1555, 1e-05
    %v1558 = vrsqrt.pop %v1556
    %v1559 = vmul.f32 %v1558, %v1556
    %v1560 = vmul.f32 %v1559, %v1558
    %v1561 = vmul.f32 0.5, %v1560
    %v1562 = vsub.f32 1.5, %v1561
    %v1563 = vmul.f32 %v1558, %v1562
    %vm1564 = vweird.f32 %v1556
    %vm1565 = vweird.f32 %v1558
    %vm1566 = vmor %vm1564, %vm1565
    %v1567 = vsel %vm1566, %v1558, %v1563
    %v1568 = vrsqrt.pop %v1557
    %v1569 = vmul.f32 %v1568, %v1557
    %v1570 = vmul.f32 %v1569, %v1568
    %v1571 = vmul.f32 0.5, %v1570
    %v1572 = vsub.f32 1.5, %v1571
    %v1573 = vmul.f32 %v1568, %v1572
    %vm1574 = vweird.f32 %v1557
    %vm1575 = vweird.f32 %v1568
    %vm1576 = vmor %vm1574, %vm1575
    %v1577 = vsel %vm1576, %v1568, %v1573
    %v1578 = vmul.f32 %v1544, %v1567
    %v1579 = vmul.f32 %v1545, %v1577
    %v1580 = vld [vmem:[%s4 + $0x19] sm:$0x1]
    %v1581 = vperm.slane %v1580, 0
    %v1582 = vmul.f32 %v1578, %v1581
    %v1583 = vmul.f32 %v1579, %v1581
    %v1584 = vld [vmem:[%s4 + $0x1a] sm:$0x1]
    %v1585 = vperm.slane %v1584, 0
    %v1586 = vadd.f32 %v1582, %v1585
    %v1587 = vadd.f32 %v1583, %v1585
    %v1588 = vld [vmem:[#allocation2 + $0x14] sm:$0xf]
    %v1589 = vld [vmem:[#allocation2 + $0x2c] sm:$0xf]
    %v1590 = vld [vmem:[#allocation2 + $0x44] sm:$0xf]
    %v1591 = vld [vmem:[#allocation2 + $0x5c] sm:$0xf]
    %v1592 = vpack.c.bf16 %v1587, %v1586
    %v1593 = vld [vmem:[%s4 + $0x15] sm:$0x1]
    %v1594 = vperm.slane %v1593, 0
    %v1599 = vunpack.c.l.b16 %v1588
    %v1600 = vunpack.c.l.b16 %v1589
    %v1601 = vunpack.c.l.b16 %v1590
    %v1602 = vunpack.c.l.b16 %v1591
    %v1603 = vpack.c.b16 %v1600, %v1599
    %v1604 = vpack.c.b16 %v1602, %v1601
    %v1608 = vsel %vm72, %v1592, 0
    %1610 = vmatpush.bf16.msra.mxu0 0
    %1611 = vmatpush.bf16.msra.mxu0 0
    %1612 = vmatpush.bf16.msra.mxu0 0
    %1613 = vmatpush.bf16.msra.mxu0 0
    %1614 = vmatpush.bf16.msra.mxu0 0
    %1615 = vmatpush.bf16.msra.mxu0 0
    %1616 = vmatpush.bf16.msra.mxu0 %v1604
    %1617 = vmatpush.bf16.msra.mxu0 %v1603
    %1618 = vmatmul.bf16.gmra.mxu0 %v1608
    %v1619 = vpop.f32.mrf.mxu0
    %v1620 = vadd.f32 %v1594, %v1619
    %v1621 = vpop.f32.mrf.mxu0
    %v1622 = vadd.f32 %v1594, %v1621
    %1623 = vdwg.mxu0
    %v1624 = vmul.f32 %v1620, 0.5
    %v1625 = vmul.f32 %v1622, 0.5
    %v1626 = vmul.f32 %v1620, 0.70710677
    %v1627 = vmul.f32 %v1622, 0.70710677
    %v1628 = vmul.f32 %v1626, %v1626
    %v1629 = vmin.f32 16.0, %v1628
    %v1630 = vmul.f32 %v1629, 2.1237322e-06
    %v1631 = vadd.f32 %v1630, 0.00028619796
    %v1632 = vmul.f32 %v1629, %v1631
    %v1633 = vadd.f32 %v1632, 0.0036580483
    %v1634 = vmul.f32 %v1629, %v1633
    %v1635 = vadd.f32 %v1634, 0.05243302
    %v1636 = vmul.f32 %v1629, %v1635
    %v1637 = vadd.f32 %v1636, 0.18741608
    %v1638 = vmul.f32 %v1629, %v1637
    %v1639 = vadd.f32 %v1638, 1.1283791
    %v1640 = vmul.f32 %v1626, %v1639
    %v1641 = vmul.f32 %v1629, 3.8918573e-05
    %v1642 = vadd.f32 %v1641, 0.001143296
    %v1643 = vmul.f32 %v1629, %v1642
    %v1644 = vadd.f32 %v1643, 0.014752088
    %v1645 = vmul.f32 %v1629, %v1644
    %v1646 = vadd.f32 %v1645, 0.112945676
    %v1647 = vmul.f32 %v1629, %v1646
    %v1648 = vadd.f32 %v1647, 0.4994258
    %v1649 = vmul.f32 %v1629, %v1648
    %v1650 = vadd.f32 %v1649, 1.0
    %v1651 = vrcp.pop %v1650
    %v1652 = vmul.f32 %v1650, %v1651
    %v1653 = vsub.f32 1.0, %v1652
    %v1654 = vmul.f32 %v1651, %v1653
    %v1655 = vadd.f32 %v1651, %v1654
    %vm1656 = vweird.f32 %v1650
    %vm1657 = vweird.f32 %v1651
    %vm1658 = vmor %vm1656, %vm1657
    %v1659 = vsel %vm1658, %v1651, %v1655
    %v1660 = vand.u32 2147483647, %v1650
    %vm1661 = vcmp.eq.f32.partialorder %v1660, 8.507059e+37
    %v1662 = vand.u32 %v1650, 2147483648
    %v1663 = vor.u32 1.1754944e-38, %v1662
    %v1664 = vsel %vm1661, %v1663, %v1659
    %v1665 = vmul.f32 %v1640, %v1664
    %v1666 = vmin.f32 %v1665, 1.0
    %v1667 = vmax.f32 %v1666, -1.0
    %v1668 = vmul.f32 %v1627, %v1627
    %v1669 = vmin.f32 16.0, %v1668
    %v1670 = vmul.f32 %v1669, 2.1237322e-06
    %v1671 = vadd.f32 %v1670, 0.00028619796
    %v1672 = vmul.f32 %v1669, %v1671
    %v1673 = vadd.f32 %v1672, 0.0036580483
    %v1674 = vmul.f32 %v1669, %v1673
    %v1675 = vadd.f32 %v1674, 0.05243302
    %v1676 = vmul.f32 %v1669, %v1675
    %v1677 = vadd.f32 %v1676, 0.18741608
    %v1678 = vmul.f32 %v1669, %v1677
    %v1679 = vadd.f32 %v1678, 1.1283791
    %v1680 = vmul.f32 %v1627, %v1679
    %v1681 = vmul.f32 %v1669, 3.8918573e-05
    %v1682 = vadd.f32 %v1681, 0.001143296
    %v1683 = vmul.f32 %v1669, %v1682
    %v1684 = vadd.f32 %v1683, 0.014752088
    %v1685 = vmul.f32 %v1669, %v1684
    %v1686 = vadd.f32 %v1685, 0.112945676
    %v1687 = vmul.f32 %v1669, %v1686
    %v1688 = vadd.f32 %v1687, 0.4994258
    %v1689 = vmul.f32 %v1669, %v1688
    %v1690 = vadd.f32 %v1689, 1.0
    %v1691 = vrcp.pop %v1690
    %v1692 = vmul.f32 %v1690, %v1691
    %v1693 = vsub.f32 1.0, %v1692
    %v1694 = vmul.f32 %v1691, %v1693
    %v1695 = vadd.f32 %v1691, %v1694
    %vm1696 = vweird.f32 %v1690
    %vm1697 = vweird.f32 %v1691
    %vm1698 = vmor %vm1696, %vm1697
    %v1699 = vsel %vm1698, %v1691, %v1695
    %v1700 = vand.u32 2147483647, %v1690
    %vm1701 = vcmp.eq.f32.partialorder %v1700, 8.507059e+37
    %v1702 = vand.u32 %v1690, 2147483648
    %v1703 = vor.u32 1.1754944e-38, %v1702
    %v1704 = vsel %vm1701, %v1703, %v1699
    %v1705 = vmul.f32 %v1680, %v1704
    %v1706 = vmin.f32 %v1705, 1.0
    %v1707 = vmax.f32 %v1706, -1.0
    %v1708 = vadd.f32 %v1667, 1.0
    %v1709 = vadd.f32 %v1707, 1.0
    %v1710 = vmul.f32 %v1624, %v1708
    %v1711 = vmul.f32 %v1625, %v1709
    %v1712 = vld [vmem:[%s3] sm:$0xf]
    %v1713 = vld [vmem:[%s3 + $0x4] sm:$0xf]
    %v1714 = vld [vmem:[%s3 + $0x8] sm:$0xf]
    %v1715 = vld [vmem:[%s3 + $0xc] sm:$0xf]
    %v1716 = vld [vmem:[%s3 + $0x10] sm:$0xf]
    %v1717 = vld [vmem:[%s3 + $0x14] sm:$0xf]
    %v1718 = vld [vmem:[%s3 + $0x18] sm:$0xf]
    %v1719 = vld [vmem:[%s3 + $0x1c] sm:$0xf]
    %v1720 = vld [vmem:[%s3 + $0x20] sm:$0xf]
    %v1721 = vld [vmem:[%s3 + $0x24] sm:$0xf]
    %v1722 = vld [vmem:[%s3 + $0x28] sm:$0xf]
    %v1723 = vld [vmem:[%s3 + $0x2c] sm:$0xf]
    %v1724 = vld [vmem:[%s3 + $0x30] sm:$0xf]
    %v1725 = vld [vmem:[%s3 + $0x34] sm:$0xf]
    %v1726 = vld [vmem:[%s3 + $0x38] sm:$0xf]
    %v1727 = vld [vmem:[%s3 + $0x3c] sm:$0xf]
    %v1728 = vpack.c.bf16 %v1711, %v1710
    %v1729 = vld [vmem:[%s4 + $0x16] sm:$0x1]
    %v1730 = vperm.slane %v1729, 0
    %v1747 = vunpack.c.l.b16 %v1712
    %v1748 = vunpack.c.l.b16 %v1713
    %v1749 = vunpack.c.l.b16 %v1714
    %v1750 = vunpack.c.l.b16 %v1715
    %v1751 = vunpack.c.l.b16 %v1716
    %v1752 = vunpack.c.l.b16 %v1717
    %v1753 = vunpack.c.l.b16 %v1718
    %v1754 = vunpack.c.l.b16 %v1719
    %v1755 = vunpack.c.l.b16 %v1720
    %v1756 = vunpack.c.l.b16 %v1721
    %v1757 = vunpack.c.l.b16 %v1722
    %v1758 = vunpack.c.l.b16 %v1723
    %v1759 = vunpack.c.l.b16 %v1724
    %v1760 = vunpack.c.l.b16 %v1725
    %v1761 = vunpack.c.l.b16 %v1726
    %v1762 = vunpack.c.l.b16 %v1727
    %v1763 = vpack.c.b16 %v1748, %v1747
    %v1764 = vpack.c.b16 %v1750, %v1749
    %v1765 = vpack.c.b16 %v1752, %v1751
    %v1766 = vpack.c.b16 %v1754, %v1753
    %v1767 = vpack.c.b16 %v1756, %v1755
    %v1768 = vpack.c.b16 %v1758, %v1757
    %v1769 = vpack.c.b16 %v1760, %v1759
    %v1770 = vpack.c.b16 %v1762, %v1761
    %1779 = vmatpush.bf16.msra.mxu0 %v1770
    %1780 = vmatpush.bf16.msra.mxu0 %v1769
    %1781 = vmatpush.bf16.msra.mxu0 %v1768
    %1782 = vmatpush.bf16.msra.mxu0 %v1767
    %1783 = vmatpush.bf16.msra.mxu0 %v1766
    %1784 = vmatpush.bf16.msra.mxu0 %v1765
    %1785 = vmatpush.bf16.msra.mxu0 %v1764
    %1786 = vmatpush.bf16.msra.mxu0 %v1763
    %1787 = vmatmul.bf16.gmra.mxu0 %v1728
    %v1788 = vpop.f32.mrf.mxu0
    %v1789 = vadd.f32 %v1730, %v1788
    %v1790 = vpop.f32.mrf.mxu0
    %v1791 = vadd.f32 %v1730, %v1790
    %1792 = vdwg.mxu0
    %v1793 = vadd.f32 %v1586, %v1789
    %v1794 = vadd.f32 %v1587, %v1791
    %v1795 = vsel %vm72, %v1793, 0.0
    %1796 = vadd.xlane.f32.xlu0 %v1795
    %v1797 = vpop.xlane.xlu0 %1796
    %v1798 = vsel %vm72, %v1794, 0.0
    %1799 = vadd.xlane.f32.xlu0 %v1798
    %v1800 = vpop.xlane.xlu0 %1799
    %v1801 = vmul.f32 %v1797, %v764
    %v1802 = vmul.f32 %v1800, %v764
    %v1803 = vsub.f32 %v1793, %v1801
    %v1804 = vsub.f32 %v1794, %v1802
    %v1805 = vmul.f32 %v1803, %v1803
    %v1806 = vmul.f32 %v1804, %v1804
    %v1807 = vsel %vm72, %v1805, 0.0
    %1808 = vadd.xlane.f32.xlu0 %v1807
    %v1809 = vpop.xlane.xlu0 %1808
    %v1810 = vsel %vm72, %v1806, 0.0
    %1811 = vadd.xlane.f32.xlu0 %v1810
    %v1812 = vpop.xlane.xlu0 %1811
    %v1813 = vmul.f32 %v1809, %v764
    %v1814 = vmul.f32 %v1812, %v764
    %v1815 = vadd.f32 %v1813, 1e-05
    %v1816 = vadd.f32 %v1814, 1e-05
    %v1817 = vrsqrt.pop %v1815
    %v1818 = vmul.f32 %v1817, %v1815
    %v1819 = vmul.f32 %v1818, %v1817
    %v1820 = vmul.f32 0.5, %v1819
    %v1821 = vsub.f32 1.5, %v1820
    %v1822 = vmul.f32 %v1817, %v1821
    %vm1823 = vweird.f32 %v1815
    %vm1824 = vweird.f32 %v1817
    %vm1825 = vmor %vm1823, %vm1824
    %v1826 = vsel %vm1825, %v1817, %v1822
    %v1827 = vrsqrt.pop %v1816
    %v1828 = vmul.f32 %v1827, %v1816
    %v1829 = vmul.f32 %v1828, %v1827
    %v1830 = vmul.f32 0.5, %v1829
    %v1831 = vsub.f32 1.5, %v1830
    %v1832 = vmul.f32 %v1827, %v1831
    %vm1833 = vweird.f32 %v1816
    %vm1834 = vweird.f32 %v1827
    %vm1835 = vmor %vm1833, %vm1834
    %v1836 = vsel %vm1835, %v1827, %v1832
    %v1837 = vmul.f32 %v1803, %v1826
    %v1838 = vmul.f32 %v1804, %v1836
    %v1839 = vld [vmem:[%s4 + $0x1b] sm:$0x1]
    %v1840 = vperm.slane %v1839, 0
    %v1841 = vmul.f32 %v1837, %v1840
    %v1842 = vmul.f32 %v1838, %v1840
    %v1843 = vld [vmem:[%s4 + $0x1c] sm:$0x1]
    %v1844 = vperm.slane %v1843, 0
    %v1845 = vadd.f32 %v1841, %v1844
    %v1846 = vadd.f32 %v1842, %v1844
    %v1847 = vsel %vm72, %v1845, 0.0
    %v1848 = vsel %vm72, %v1846, 0.0
    %1849 = vst [vmem:[#allocation5] sm:$0xff] %v1847
    %1850 = vst [vmem:[#allocation5 + $0x8] sm:$0xff] %v1848
    // Predicated region
    $region26: #{tpu_custom_call.1} parent=1 // pred_check
      _
    $region27: #{tpu_custom_call.1} parent=1 // pred_check_branch
      %1852 = sbr.rel (0) target = $region29
    $region28: #{tpu_custom_call.1} parent=1 // pred_region
      %1854 = vsyncadd [#allocation4], 0
      %s1855 = sshll.u32 [#allocation5], 4
      %s1856 = int_to_ptr.vmem [resolvable:$true] %s1855
      %s1857 = sshll.u32 %s5, 4
      %s1858 = int_to_ptr.hbm [resolvable:$true] %s1857
      %1863 = dma.vmem_to_hbm [thread:$0]  %s1856, 256, %s1858, [#allocation4], 128, 128, 8
    $region29: #{tpu_custom_call.1} parent=1 // pred_fallthru
      _
    // Predicated region
    $region30: #{tpu_custom_call.1} parent=1 // pred_check
      _
    $region31: #{tpu_custom_call.1} parent=1 // pred_check_branch
      %1865 = sbr.rel (0) target = $region33
    $region32: #{tpu_custom_call.1} parent=1 // pred_region
      %1867 = dma.done [#allocation4], 256
    $region33: #{tpu_custom_call.1} parent=1 // pred_fallthru
      _
    %1868 = vsyncpa [#allocation3], 1
    %1869 = vsyncpa [#allocation4], 1

</llo_original>
